<compile_context>
chip_gen: v7x
topology: tpu7x:2x2x1
jax: 0.10.0
libtpu: 0.0.40
codegen_flags: <defaults>
</compile_context>

<pallas_src>
import math
import functools

import numpy as np
import jax
import jax.numpy as jnp
from jax import lax
from jax.experimental import pallas as pl
from jax.experimental.pallas import tpu as pltpu


def _scale_processor_kernel(
    x_ref,      # (TB, L, D)   input rows for this batch tile
    pool_ref,   # (S, L)       adaptive-avg-pool matrix (shared across batch)
    mask_ref,   # (NH, NH)     block-diagonal additive attention mask (0 / -1e30)
    wqkv_ref,   # (D, 3D)      fused in-projection (Wq/sqrt(dh) | Wk | Wv), transposed
    bqkv_ref,   # (1, 3D)
    wo_ref,     # (D, D)       attention out-projection, transposed
    bo_ref,     # (1, D)
    g_ref,      # (1, D)       LayerNorm gamma
    beta_ref,   # (1, D)       LayerNorm beta
    wp_ref,     # (D, D)       scale_proj weight, transposed
    bp_ref,     # (1, D)
    out_ref,    # (TB*S, D)
    *, num_heads, eps, tb,
):
    D = wo_ref.shape[0]
    H = num_heads
    dh = D // H
    S, L = pool_ref.shape

    pool = pool_ref[...]

    # 1) Adaptive average pool over the sequence axis (L -> S), per batch element:
    #    (S, L) @ (L, D) each -- no block-diagonal kron matrix.
    scaled = jnp.concatenate(
        [jnp.dot(pool, x_ref[b], preferred_element_type=jnp.float32)
         for b in range(tb)], axis=0)                                    # (TB*S, D)

    # 2) Fused Q/K/V in-projection (1/sqrt(dh) already folded into the Q columns).
    qkv = jnp.dot(scaled, wqkv_ref[...],
                  preferred_element_type=jnp.float32) + bqkv_ref[...]    # (TB*S, 3D)

    # 3) Head-major stacking: (b, h) blocks of S rows x dh cols -> (NH, dh) slabs.
    q_parts, k_parts, v_parts = [], [], []
    for b in range(tb):
        rows = slice(b * S, (b + 1) * S)
        for h in range(H):
            q_parts.append(qkv[rows, h * dh:(h + 1) * dh])
            k_parts.append(qkv[rows, D + h * dh:D + (h + 1) * dh])
            v_parts.append(qkv[rows, 2 * D + h * dh:2 * D + (h + 1) * dh])
    qs = jnp.concatenate(q_parts, axis=0)                                # (NH, dh)
    ks = jnp.concatenate(k_parts, axis=0)                                # (NH, dh)
    vs = jnp.concatenate(v_parts, axis=0)                                # (NH, dh)

    # 4) ONE masked attention matmul for all batches & heads.  The block-diagonal
    #    additive mask keeps (b, h) blocks from attending to each other.
    logits = lax.dot_general(qs, ks, (((1,), (1,)), ((), ())),
                             preferred_element_type=jnp.float32)         # (NH, NH)
    logits = logits + mask_ref[...]
    m = jnp.max(logits, axis=-1, keepdims=True)
    e = jnp.exp(logits - m)
    p = e / jnp.sum(e, axis=-1, keepdims=True)          # exact division for parity
    ctx = jnp.dot(p, vs, preferred_element_type=jnp.float32)             # (NH, dh)
    # TODO(synk): attention dropout (p=0.1) is a train-time op; eval forward omits it.

    # 5) Re-assemble heads into (TB*S, D) and apply ONE K=D out-projection.
    ctx_rows = []
    for b in range(tb):
        heads = [ctx[(b * H + h) * S:(b * H + h + 1) * S, :] for h in range(H)]
        ctx_rows.append(jnp.concatenate(heads, axis=1))                  # (S, D)
    ctx_full = jnp.concatenate(ctx_rows, axis=0)                         # (TB*S, D)
    attn = jnp.dot(ctx_full, wo_ref[...],
                   preferred_element_type=jnp.float32) + bo_ref[...]

    # 6) Residual + LayerNorm (PyTorch convention: eps inside rsqrt) + scale_proj.
    y = attn + scaled
    mu = jnp.mean(y, axis=-1, keepdims=True)
    var = jnp.mean(jnp.square(y - mu), axis=-1, keepdims=True)
    normed = (y - mu) * lax.rsqrt(var + eps) * g_ref[...] + beta_ref[...]
    out_ref[...] = jnp.dot(normed, wp_ref[...],
                           preferred_element_type=jnp.float32) + bp_ref[...]


def _adaptive_pool_matrix(out_len, in_len):
    """PyTorch adaptive_avg_pool binning: bin i = [floor(i*L/S), ceil((i+1)*L/S))."""
    m = np.zeros((out_len, in_len), np.float32)
    for i in range(out_len):
        start = (i * in_len) // out_len
        end = -((-(i + 1) * in_len) // out_len)  # ceil((i+1)*L/S)
        m[i, start:end] = 1.0 / (end - start)
    return m


def _num_tensorcores():
    """Best-effort TensorCore count: 2 on v7x / megacore parts, else 1."""
    try:
        info = pltpu.get_tpu_info()
        for name in ("num_cores", "num_tensorcores", "tensorcore_count",
                     "core_count", "num_cores_per_chip"):
            v = getattr(info, name, None)
            if v is not None:
                v = int(v)
                if v > 0:
                    return v
    except Exception:
        pass
    try:
        kind = jax.devices()[0].device_kind.lower()
        if any(t in kind for t in ("v4", "v5p", "v7", "7x")):
            return 2
    except Exception:
        pass
    return 1


def _choose_batch_tile(B, S, H, num_cores):
    # Keep the fused-attention row count NH = TB*H*S at/below 256 so the masked
    # logits matmul fills (but does not overflow) a 256-wide MXU output tile and
    # the wasted off-diagonal flops stay bounded.  TB must divide B.
    tb = max(1, min(B, 256 // (H * S)))
    while B % tb:
        tb -= 1
    # Only widen the grid (shrink TB) when there is a second TensorCore to feed;
    # on single-core parts extra grid steps are pure per-step overhead.
    if num_cores > 1 and B // tb < num_cores:
        for cand in range(tb - 1, 0, -1):
            if B % cand == 0 and B // cand >= num_cores:
                tb = cand
                break
    return tb


def scale_processor_forward(x, params, *, num_heads, scale_factor):
    B, L, D = x.shape
    assert D % num_heads == 0, "hidden_size must be divisible by num_heads"
    scaled_len = L // scale_factor
    assert scaled_len == 1, (
        "The PyTorch module as written only runs when L // scale_factor == 1")
    S = D                      # pooled sequence length produced by the torch code
    H = num_heads
    dh = D // H

    num_cores = _num_tensorcores()
    TB = _choose_batch_tile(B, S, H, num_cores)
    steps = B // TB
    NH = TB * H * S

    pool = jnp.asarray(_adaptive_pool_matrix(S, L))                        # (S, L)

    # Block-diagonal additive mask: each (b, h) block of S rows only attends within
    # itself.  0 on the diagonal blocks, -1e30 elsewhere.
    mask_np = np.kron(np.eye(TB * H, dtype=np.float32),
                      np.ones((S, S), np.float32))
    mask = jnp.asarray(np.where(mask_np > 0.0, 0.0, -1e30).astype(np.float32))

    # Fuse Q/K/V projections; fold the 1/sqrt(dh) attention scale into Wq / bq.
    inv = 1.0 / math.sqrt(dh)
    wqkv = jnp.concatenate(
        [params["wq_t"] * inv, params["wk_t"], params["wv_t"]], axis=1)    # (D, 3D)
    bqkv = jnp.concatenate(
        [params["bq"] * inv, params["bk"], params["bv"]], axis=1)          # (1, 3D)
    # (bf16 weights + f32 accumulation is the right scaling path for larger D/B on
    #  v6e/v7x; at these sizes the kernel is latency-bound so weights stay f32.)

    kernel = functools.partial(_scale_processor_kernel,
                               num_heads=H, eps=1e-5, tb=TB)

    def fixed(shape):
        return pl.BlockSpec(shape, lambda g: tuple(0 for _ in shape))

    in_specs = [
        pl.BlockSpec((TB, L, D), lambda g: (g, 0, 0)),  # x: batch-tiled, pipelined
        fixed((S, L)),                                  # pool matrix (constant)
        fixed((NH, NH)),                                # attention mask (constant)
        fixed((D, 3 * D)), fixed((1, 3 * D)),           # fused Wqkv^T, bqkv
        fixed((D, D)), fixed((1, D)),                   # Wo^T, bo
        fixed((1, D)), fixed((1, D)),                   # ln gamma, beta
        fixed((D, D)), fixed((1, D)),                   # Wp^T, bp
    ]
    out_specs = pl.BlockSpec((TB * S, D), lambda g: (g, 0))

    args = (x, pool, mask, wqkv, bqkv,
            params["wo_t"], params["bo"], params["gamma"], params["beta"],
            params["wp_t"], params["bp"])

    # Advisory cost hint matching the work the kernel actually does.
    flops_step = (TB * 2 * S * L * D          # per-batch pooling matmuls
                  + 2 * TB * S * D * 3 * D    # fused QKV projection
                  + 2 * NH * NH * dh          # masked logits
                  + 2 * NH * NH * dh          # context
                  + 2 * TB * S * D * D        # out-projection
                  + 2 * TB * S * D * D)       # final scale_proj
    const_bytes = sum(int(np.prod(a.shape)) * 4 for a in args[1:])
    cost = pl.CostEstimate(
        flops=int(steps * flops_step),
        transcendentals=int(steps * NH * NH),            # exp
        bytes_accessed=int(4 * (B * L * D + B * S * D) + steps * const_bytes),
    )

    out_flat = pl.pallas_call(
        kernel,
        out_shape=jax.ShapeDtypeStruct((B * S, D), jnp.float32),
        grid_spec=pltpu.PrefetchScalarGridSpec(
            num_scalar_prefetch=0,
            grid=(steps,),
            in_specs=in_specs,
            out_specs=out_specs,
        ),
        compiler_params=pltpu.CompilerParams(dimension_semantics=("parallel",)),
        cost_estimate=cost,
    )(*args)

    # Lane-dense slab -> module-shaped output (free row-major reshape in the wrapper).
    return out_flat.reshape(B, S, D)


def _reference(x, pool, params, num_heads, eps=1e-5):
    """Pure-JAX reference for correctness check."""
    scaled = jnp.einsum("sl,bld->bsd", pool, x)
    q = scaled @ params["wq_t"] + params["bq"]
    k = scaled @ params["wk_t"] + params["bk"]
    v = scaled @ params["wv_t"] + params["bv"]
    B, S, D = scaled.shape
    dh = D // num_heads
    qh = q.reshape(B, S, num_heads, dh).transpose(0, 2, 1, 3) / math.sqrt(dh)
    kh = k.reshape(B, S, num_heads, dh).transpose(0, 2, 1, 3)
    vh = v.reshape(B, S, num_heads, dh).transpose(0, 2, 1, 3)
    p = jax.nn.softmax(jnp.einsum("bhqd,bhkd->bhqk", qh, kh), axis=-1)
    ctx = jnp.einsum("bhqk,bhkd->bhqd", p, vh).transpose(0, 2, 1, 3).reshape(B, S, D)
    attn_out = ctx @ params["wo_t"] + params["bo"]
    y = attn_out + scaled
    mean = jnp.mean(y, axis=-1, keepdims=True)
    var = jnp.mean(jnp.square(y - mean), axis=-1, keepdims=True)
    normed = (y - mean) * jax.lax.rsqrt(var + eps) * params["gamma"] + params["beta"]
    return normed @ params["wp_t"] + params["bp"]


if __name__ == "__main__":
    B, L, D = 2, 8, 32
    num_heads = 4
    scale_factor = 8  # L // scale_factor == 1: the only configuration the torch module runs

    key = jax.random.PRNGKey(0)
    ks = jax.random.split(key, 10)

    x = jax.random.normal(ks[0], (B, L, D), jnp.float32)

    # nn.MultiheadAttention: in_proj_weight (3D, D), in_proj_bias (3D,), out_proj (D, D)+(D,)
    in_proj_w = 0.05 * jax.random.normal(ks[1], (3 * D, D), jnp.float32)
    in_proj_b = 0.05 * jax.random.normal(ks[2], (3 * D,), jnp.float32)
    out_proj_w = 0.05 * jax.random.normal(ks[3], (D, D), jnp.float32)
    out_proj_b = 0.05 * jax.random.normal(ks[4], (D,), jnp.float32)
    # LayerNorm(D)
    gamma = 1.0 + 0.05 * jax.random.normal(ks[5], (D,), jnp.float32)
    beta = 0.05 * jax.random.normal(ks[6], (D,), jnp.float32)
    # scale_proj Linear(D, D)
    proj_w = 0.05 * jax.random.normal(ks[7], (D, D), jnp.float32)
    proj_b = 0.05 * jax.random.normal(ks[8], (D,), jnp.float32)

    params = {
        "wq_t": in_proj_w[:D].T, "bq": in_proj_b[:D].reshape(1, D),
        "wk_t": in_proj_w[D:2 * D].T, "bk": in_proj_b[D:2 * D].reshape(1, D),
        "wv_t": in_proj_w[2 * D:].T, "bv": in_proj_b[2 * D:].reshape(1, D),
        "wo_t": out_proj_w.T, "bo": out_proj_b.reshape(1, D),
        "gamma": gamma.reshape(1, D), "beta": beta.reshape(1, D),
        "wp_t": proj_w.T, "bp": proj_b.reshape(1, D),
    }

    out = scale_processor_forward(x, params, num_heads=num_heads, scale_factor=scale_factor)
    out = jax.block_until_ready(out)

    ref = _reference(x, jnp.asarray(_adaptive_pool_matrix(D, L)), params, num_heads)
    np.testing.assert_allclose(np.asarray(out), np.asarray(ref), rtol=1e-3, atol=1e-3)

    print("KERNEL_OK")
</pallas_src>

<mosaic_0001>
module attributes {stable_mosaic.version = 11 : i64} {
  func.func @_scale_processor_kernel(%arg0: i32, %arg1: memref<2x8x32xf32, #tpu.memory_space<vmem>>, %arg2: memref<32x8xf32, #tpu.memory_space<vmem>>, %arg3: memref<256x256xf32, #tpu.memory_space<vmem>>, %arg4: memref<32x96xf32, #tpu.memory_space<vmem>>, %arg5: memref<1x96xf32, #tpu.memory_space<vmem>>, %arg6: memref<32x32xf32, #tpu.memory_space<vmem>>, %arg7: memref<1x32xf32, #tpu.memory_space<vmem>>, %arg8: memref<1x32xf32, #tpu.memory_space<vmem>>, %arg9: memref<1x32xf32, #tpu.memory_space<vmem>>, %arg10: memref<32x32xf32, #tpu.memory_space<vmem>>, %arg11: memref<1x32xf32, #tpu.memory_space<vmem>>, %arg12: memref<64x32xf32, #tpu.memory_space<vmem>>) attributes {dimension_semantics = [#tpu.dimension_semantics<parallel>], iteration_bounds = array<i64: 1>, scalar_prefetch = 0 : i64, scratch_operands = 0 : i64, tpu.core_type = #tpu.core_type<tc>, window_params = [{transform_indices = @transform_0, window_bounds = array<i64: 2, 8, 32>}, {pipeline_mode = #tpu.pipeline_mode<synchronous>, transform_indices = @transform_1, window_bounds = array<i64: 32, 8>}, {pipeline_mode = #tpu.pipeline_mode<synchronous>, transform_indices = @transform_2, window_bounds = array<i64: 256, 256>}, {pipeline_mode = #tpu.pipeline_mode<synchronous>, transform_indices = @transform_3, window_bounds = array<i64: 32, 96>}, {pipeline_mode = #tpu.pipeline_mode<synchronous>, transform_indices = @transform_4, window_bounds = array<i64: 1, 96>}, {pipeline_mode = #tpu.pipeline_mode<synchronous>, transform_indices = @transform_5, window_bounds = array<i64: 32, 32>}, {pipeline_mode = #tpu.pipeline_mode<synchronous>, transform_indices = @transform_6, window_bounds = array<i64: 1, 32>}, {pipeline_mode = #tpu.pipeline_mode<synchronous>, transform_indices = @transform_7, window_bounds = array<i64: 1, 32>}, {pipeline_mode = #tpu.pipeline_mode<synchronous>, transform_indices = @transform_8, window_bounds = array<i64: 1, 32>}, {pipeline_mode = #tpu.pipeline_mode<synchronous>, transform_indices = @transform_9, window_bounds = array<i64: 32, 32>}, {pipeline_mode = #tpu.pipeline_mode<synchronous>, transform_indices = @transform_10, window_bounds = array<i64: 1, 32>}, {transform_indices = @transform_11, window_bounds = array<i64: 64, 32>}]} {
    %c0 = arith.constant 0 : index
    %c0_0 = arith.constant 0 : index
    %0 = vector.load %arg2[%c0, %c0_0] : memref<32x8xf32, #tpu.memory_space<vmem>>, vector<32x8xf32>
    %c0_1 = arith.constant 0 : index
    %c0_2 = arith.constant 0 : index
    %c0_3 = arith.constant 0 : index
    %1 = vector.load %arg1[%c0_1, %c0_2, %c0_3] : memref<2x8x32xf32, #tpu.memory_space<vmem>>, vector<1x8x32xf32>
    %2 = vector.shape_cast %1 : vector<1x8x32xf32> to vector<8x32xf32>
    %cst = arith.constant dense<0.000000e+00> : vector<32x32xf32>
    %3 = tpu.matmul %0, %2, %cst {dimension_numbers = #tpu.dot_dimension_numbers<[1], [0], [0], [1], [0, 0, 1, 1], [], []>} : vector<32x8xf32>, vector<8x32xf32>, vector<32x32xf32> -> vector<32x32xf32>
    %c1 = arith.constant 1 : index
    %c0_4 = arith.constant 0 : index
    %c0_5 = arith.constant 0 : index
    %4 = vector.load %arg1[%c1, %c0_4, %c0_5] : memref<2x8x32xf32, #tpu.memory_space<vmem>>, vector<1x8x32xf32>
    %5 = vector.shape_cast %4 : vector<1x8x32xf32> to vector<8x32xf32>
    %cst_6 = arith.constant dense<0.000000e+00> : vector<32x32xf32>
    %6 = tpu.matmul %0, %5, %cst_6 {dimension_numbers = #tpu.dot_dimension_numbers<[1], [0], [0], [1], [0, 0, 1, 1], [], []>} : vector<32x8xf32>, vector<8x32xf32>, vector<32x32xf32> -> vector<32x32xf32>
    %7 = tpu.concatenate %3, %6 in 0 : vector<32x32xf32>, vector<32x32xf32> -> vector<64x32xf32>
    %c0_7 = arith.constant 0 : index
    %c0_8 = arith.constant 0 : index
    %8 = vector.load %arg4[%c0_7, %c0_8] : memref<32x96xf32, #tpu.memory_space<vmem>>, vector<32x96xf32>
    %cst_9 = arith.constant dense<0.000000e+00> : vector<64x96xf32>
    %9 = tpu.matmul %7, %8, %cst_9 {dimension_numbers = #tpu.dot_dimension_numbers<[1], [0], [0], [1], [0, 0, 1, 1], [], []>} : vector<64x32xf32>, vector<32x96xf32>, vector<64x96xf32> -> vector<64x96xf32>
    %c0_10 = arith.constant 0 : index
    %c0_11 = arith.constant 0 : index
    %10 = vector.load %arg5[%c0_10, %c0_11] : memref<1x96xf32, #tpu.memory_space<vmem>>, vector<1x96xf32>
    %11 = vector.broadcast %10 : vector<1x96xf32> to vector<64x96xf32>
    %12 = arith.addf %9, %11 : vector<64x96xf32>
    %13 = vector.extract_strided_slice %12 {offsets = [0, 0], sizes = [32, 8], strides = [1, 1]} : vector<64x96xf32> to vector<32x8xf32>
    %14 = vector.extract_strided_slice %12 {offsets = [0, 32], sizes = [32, 8], strides = [1, 1]} : vector<64x96xf32> to vector<32x8xf32>
    %15 = vector.extract_strided_slice %12 {offsets = [0, 64], sizes = [32, 8], strides = [1, 1]} : vector<64x96xf32> to vector<32x8xf32>
    %16 = vector.extract_strided_slice %12 {offsets = [0, 8], sizes = [32, 8], strides = [1, 1]} : vector<64x96xf32> to vector<32x8xf32>
    %17 = vector.extract_strided_slice %12 {offsets = [0, 40], sizes = [32, 8], strides = [1, 1]} : vector<64x96xf32> to vector<32x8xf32>
    %18 = vector.extract_strided_slice %12 {offsets = [0, 72], sizes = [32, 8], strides = [1, 1]} : vector<64x96xf32> to vector<32x8xf32>
    %19 = vector.extract_strided_slice %12 {offsets = [0, 16], sizes = [32, 8], strides = [1, 1]} : vector<64x96xf32> to vector<32x8xf32>
    %20 = vector.extract_strided_slice %12 {offsets = [0, 48], sizes = [32, 8], strides = [1, 1]} : vector<64x96xf32> to vector<32x8xf32>
    %21 = vector.extract_strided_slice %12 {offsets = [0, 80], sizes = [32, 8], strides = [1, 1]} : vector<64x96xf32> to vector<32x8xf32>
    %22 = vector.extract_strided_slice %12 {offsets = [0, 24], sizes = [32, 8], strides = [1, 1]} : vector<64x96xf32> to vector<32x8xf32>
    %23 = vector.extract_strided_slice %12 {offsets = [0, 56], sizes = [32, 8], strides = [1, 1]} : vector<64x96xf32> to vector<32x8xf32>
    %24 = vector.extract_strided_slice %12 {offsets = [0, 88], sizes = [32, 8], strides = [1, 1]} : vector<64x96xf32> to vector<32x8xf32>
    %25 = vector.extract_strided_slice %12 {offsets = [32, 0], sizes = [32, 8], strides = [1, 1]} : vector<64x96xf32> to vector<32x8xf32>
    %26 = vector.extract_strided_slice %12 {offsets = [32, 32], sizes = [32, 8], strides = [1, 1]} : vector<64x96xf32> to vector<32x8xf32>
    %27 = vector.extract_strided_slice %12 {offsets = [32, 64], sizes = [32, 8], strides = [1, 1]} : vector<64x96xf32> to vector<32x8xf32>
    %28 = vector.extract_strided_slice %12 {offsets = [32, 8], sizes = [32, 8], strides = [1, 1]} : vector<64x96xf32> to vector<32x8xf32>
    %29 = vector.extract_strided_slice %12 {offsets = [32, 40], sizes = [32, 8], strides = [1, 1]} : vector<64x96xf32> to vector<32x8xf32>
    %30 = vector.extract_strided_slice %12 {offsets = [32, 72], sizes = [32, 8], strides = [1, 1]} : vector<64x96xf32> to vector<32x8xf32>
    %31 = vector.extract_strided_slice %12 {offsets = [32, 16], sizes = [32, 8], strides = [1, 1]} : vector<64x96xf32> to vector<32x8xf32>
    %32 = vector.extract_strided_slice %12 {offsets = [32, 48], sizes = [32, 8], strides = [1, 1]} : vector<64x96xf32> to vector<32x8xf32>
    %33 = vector.extract_strided_slice %12 {offsets = [32, 80], sizes = [32, 8], strides = [1, 1]} : vector<64x96xf32> to vector<32x8xf32>
    %34 = vector.extract_strided_slice %12 {offsets = [32, 24], sizes = [32, 8], strides = [1, 1]} : vector<64x96xf32> to vector<32x8xf32>
    %35 = vector.extract_strided_slice %12 {offsets = [32, 56], sizes = [32, 8], strides = [1, 1]} : vector<64x96xf32> to vector<32x8xf32>
    %36 = vector.extract_strided_slice %12 {offsets = [32, 88], sizes = [32, 8], strides = [1, 1]} : vector<64x96xf32> to vector<32x8xf32>
    %37 = tpu.concatenate %13, %16, %19, %22, %25, %28, %31, %34 in 0 : vector<32x8xf32>, vector<32x8xf32>, vector<32x8xf32>, vector<32x8xf32>, vector<32x8xf32>, vector<32x8xf32>, vector<32x8xf32>, vector<32x8xf32> -> vector<256x8xf32>
    %38 = tpu.concatenate %14, %17, %20, %23, %26, %29, %32, %35 in 0 : vector<32x8xf32>, vector<32x8xf32>, vector<32x8xf32>, vector<32x8xf32>, vector<32x8xf32>, vector<32x8xf32>, vector<32x8xf32>, vector<32x8xf32> -> vector<256x8xf32>
    %39 = tpu.concatenate %15, %18, %21, %24, %27, %30, %33, %36 in 0 : vector<32x8xf32>, vector<32x8xf32>, vector<32x8xf32>, vector<32x8xf32>, vector<32x8xf32>, vector<32x8xf32>, vector<32x8xf32>, vector<32x8xf32> -> vector<256x8xf32>
    %cst_12 = arith.constant dense<0.000000e+00> : vector<256x256xf32>
    %40 = tpu.matmul %37, %38, %cst_12 {dimension_numbers = #tpu.dot_dimension_numbers<[1], [1], [0], [0], [0, 0, 1, 0], [], []>} : vector<256x8xf32>, vector<256x8xf32>, vector<256x256xf32> -> vector<256x256xf32>
    %c0_13 = arith.constant 0 : index
    %c0_14 = arith.constant 0 : index
    %41 = vector.load %arg3[%c0_13, %c0_14] : memref<256x256xf32, #tpu.memory_space<vmem>>, vector<256x256xf32>
    %42 = arith.addf %40, %41 : vector<256x256xf32>
    %cst_15 = arith.constant dense<0xFF800000> : vector<256xf32>
    %43 = vector.multi_reduction <maximumf>, %42, %cst_15 [1] : vector<256x256xf32> to vector<256xf32>
    %44 = vector.shape_cast %43 : vector<256xf32> to vector<256x1xf32>
    %45 = vector.broadcast %44 : vector<256x1xf32> to vector<256x256xf32>
    %46 = arith.subf %42, %45 : vector<256x256xf32>
    %47 = math.exp %46 : vector<256x256xf32>
    %cst_16 = arith.constant dense<0.000000e+00> : vector<256xf32>
    %48 = vector.multi_reduction <add>, %47, %cst_16 [1] : vector<256x256xf32> to vector<256xf32>
    %49 = vector.shape_cast %48 : vector<256xf32> to vector<256x1xf32>
    %50 = vector.broadcast %49 : vector<256x1xf32> to vector<256x256xf32>
    %51 = arith.divf %47, %50 : vector<256x256xf32>
    %cst_17 = arith.constant dense<0.000000e+00> : vector<256x8xf32>
    %52 = tpu.matmul %51, %39, %cst_17 {dimension_numbers = #tpu.dot_dimension_numbers<[1], [0], [0], [1], [0, 0, 1, 1], [], []>} : vector<256x256xf32>, vector<256x8xf32>, vector<256x8xf32> -> vector<256x8xf32>
    %53 = vector.extract_strided_slice %52 {offsets = [0, 0], sizes = [32, 8], strides = [1, 1]} : vector<256x8xf32> to vector<32x8xf32>
    %54 = vector.extract_strided_slice %52 {offsets = [32, 0], sizes = [32, 8], strides = [1, 1]} : vector<256x8xf32> to vector<32x8xf32>
    %55 = vector.extract_strided_slice %52 {offsets = [64, 0], sizes = [32, 8], strides = [1, 1]} : vector<256x8xf32> to vector<32x8xf32>
    %56 = vector.extract_strided_slice %52 {offsets = [96, 0], sizes = [32, 8], strides = [1, 1]} : vector<256x8xf32> to vector<32x8xf32>
    %57 = tpu.concatenate %53, %54, %55, %56 in 1 : vector<32x8xf32>, vector<32x8xf32>, vector<32x8xf32>, vector<32x8xf32> -> vector<32x32xf32>
    %58 = vector.extract_strided_slice %52 {offsets = [128, 0], sizes = [32, 8], strides = [1, 1]} : vector<256x8xf32> to vector<32x8xf32>
    %59 = vector.extract_strided_slice %52 {offsets = [160, 0], sizes = [32, 8], strides = [1, 1]} : vector<256x8xf32> to vector<32x8xf32>
    %60 = vector.extract_strided_slice %52 {offsets = [192, 0], sizes = [32, 8], strides = [1, 1]} : vector<256x8xf32> to vector<32x8xf32>
    %61 = vector.extract_strided_slice %52 {offsets = [224, 0], sizes = [32, 8], strides = [1, 1]} : vector<256x8xf32> to vector<32x8xf32>
    %62 = tpu.concatenate %58, %59, %60, %61 in 1 : vector<32x8xf32>, vector<32x8xf32>, vector<32x8xf32>, vector<32x8xf32> -> vector<32x32xf32>
    %63 = tpu.concatenate %57, %62 in 0 : vector<32x32xf32>, vector<32x32xf32> -> vector<64x32xf32>
    %c0_18 = arith.constant 0 : index
    %c0_19 = arith.constant 0 : index
    %64 = vector.load %arg6[%c0_18, %c0_19] : memref<32x32xf32, #tpu.memory_space<vmem>>, vector<32x32xf32>
    %cst_20 = arith.constant dense<0.000000e+00> : vector<64x32xf32>
    %65 = tpu.matmul %63, %64, %cst_20 {dimension_numbers = #tpu.dot_dimension_numbers<[1], [0], [0], [1], [0, 0, 1, 1], [], []>} : vector<64x32xf32>, vector<32x32xf32>, vector<64x32xf32> -> vector<64x32xf32>
    %c0_21 = arith.constant 0 : index
    %c0_22 = arith.constant 0 : index
    %66 = vector.load %arg7[%c0_21, %c0_22] : memref<1x32xf32, #tpu.memory_space<vmem>>, vector<1x32xf32>
    %67 = vector.broadcast %66 : vector<1x32xf32> to vector<64x32xf32>
    %68 = arith.addf %65, %67 : vector<64x32xf32>
    %69 = arith.addf %68, %7 : vector<64x32xf32>
    %cst_23 = arith.constant dense<0.000000e+00> : vector<64xf32>
    %70 = vector.multi_reduction <add>, %69, %cst_23 [1] : vector<64x32xf32> to vector<64xf32>
    %71 = vector.shape_cast %70 : vector<64xf32> to vector<64x1xf32>
    %cst_24 = arith.constant 3.200000e+01 : f32
    %72 = vector.broadcast %cst_24 : f32 to vector<64x1xf32>
    %73 = arith.divf %71, %72 : vector<64x1xf32>
    %74 = vector.broadcast %73 : vector<64x1xf32> to vector<64x32xf32>
    %75 = arith.subf %69, %74 : vector<64x32xf32>
    %76 = arith.mulf %75, %75 : vector<64x32xf32>
    %cst_25 = arith.constant dense<0.000000e+00> : vector<64xf32>
    %77 = vector.multi_reduction <add>, %76, %cst_25 [1] : vector<64x32xf32> to vector<64xf32>
    %78 = vector.shape_cast %77 : vector<64xf32> to vector<64x1xf32>
    %cst_26 = arith.constant 3.200000e+01 : f32
    %79 = vector.broadcast %cst_26 : f32 to vector<64x1xf32>
    %80 = arith.divf %78, %79 : vector<64x1xf32>
    %81 = vector.broadcast %73 : vector<64x1xf32> to vector<64x32xf32>
    %82 = arith.subf %69, %81 : vector<64x32xf32>
    %cst_27 = arith.constant 9.99999974E-6 : f32
    %83 = vector.broadcast %cst_27 : f32 to vector<64x1xf32>
    %84 = arith.addf %80, %83 : vector<64x1xf32>
    %85 = math.rsqrt %84 : vector<64x1xf32>
    %86 = vector.broadcast %85 : vector<64x1xf32> to vector<64x32xf32>
    %87 = arith.mulf %82, %86 : vector<64x32xf32>
    %c0_28 = arith.constant 0 : index
    %c0_29 = arith.constant 0 : index
    %88 = vector.load %arg8[%c0_28, %c0_29] : memref<1x32xf32, #tpu.memory_space<vmem>>, vector<1x32xf32>
    %89 = vector.broadcast %88 : vector<1x32xf32> to vector<64x32xf32>
    %90 = arith.mulf %87, %89 : vector<64x32xf32>
    %c0_30 = arith.constant 0 : index
    %c0_31 = arith.constant 0 : index
    %91 = vector.load %arg9[%c0_30, %c0_31] : memref<1x32xf32, #tpu.memory_space<vmem>>, vector<1x32xf32>
    %92 = vector.broadcast %91 : vector<1x32xf32> to vector<64x32xf32>
    %93 = arith.addf %90, %92 : vector<64x32xf32>
    %c0_32 = arith.constant 0 : index
    %c0_33 = arith.constant 0 : index
    %94 = vector.load %arg10[%c0_32, %c0_33] : memref<32x32xf32, #tpu.memory_space<vmem>>, vector<32x32xf32>
    %cst_34 = arith.constant dense<0.000000e+00> : vector<64x32xf32>
    %95 = tpu.matmul %93, %94, %cst_34 {dimension_numbers = #tpu.dot_dimension_numbers<[1], [0], [0], [1], [0, 0, 1, 1], [], []>} : vector<64x32xf32>, vector<32x32xf32>, vector<64x32xf32> -> vector<64x32xf32>
    %c0_35 = arith.constant 0 : index
    %c0_36 = arith.constant 0 : index
    %96 = vector.load %arg11[%c0_35, %c0_36] : memref<1x32xf32, #tpu.memory_space<vmem>>, vector<1x32xf32>
    %97 = vector.broadcast %96 : vector<1x32xf32> to vector<64x32xf32>
    %98 = arith.addf %95, %97 : vector<64x32xf32>
    %c0_37 = arith.constant 0 : index
    %c0_38 = arith.constant 0 : index
    %99 = vector.load %arg12[%c0_37, %c0_38] : memref<64x32xf32, #tpu.memory_space<vmem>>, vector<64x32xf32>
    tpu.vector_store %arg12[%c0_37, %c0_38], %98 {strides = array<i32>} : memref<64x32xf32, #tpu.memory_space<vmem>>, vector<64x32xf32>,
    return
  }
  func.func @transform_0(%arg0: i32) -> (i32, i32, i32) {
    %c0_i32 = arith.constant 0 : i32
    %c0_i32_0 = arith.constant 0 : i32
    %c0_i32_1 = arith.constant 0 : i32
    return %arg0, %c0_i32, %c0_i32_0 : i32, i32, i32
  }
  func.func @transform_1(%arg0: i32) -> (i32, i32) {
    %c0_i32 = arith.constant 0 : i32
    %c0_i32_0 = arith.constant 0 : i32
    %c0_i32_1 = arith.constant 0 : i32
    return %c0_i32, %c0_i32_0 : i32, i32
  }
  func.func @transform_2(%arg0: i32) -> (i32, i32) {
    %c0_i32 = arith.constant 0 : i32
    %c0_i32_0 = arith.constant 0 : i32
    %c0_i32_1 = arith.constant 0 : i32
    return %c0_i32, %c0_i32_0 : i32, i32
  }
  func.func @transform_3(%arg0: i32) -> (i32, i32) {
    %c0_i32 = arith.constant 0 : i32
    %c0_i32_0 = arith.constant 0 : i32
    %c0_i32_1 = arith.constant 0 : i32
    return %c0_i32, %c0_i32_0 : i32, i32
  }
  func.func @transform_4(%arg0: i32) -> (i32, i32) {
    %c0_i32 = arith.constant 0 : i32
    %c0_i32_0 = arith.constant 0 : i32
    %c0_i32_1 = arith.constant 0 : i32
    return %c0_i32, %c0_i32_0 : i32, i32
  }
  func.func @transform_5(%arg0: i32) -> (i32, i32) {
    %c0_i32 = arith.constant 0 : i32
    %c0_i32_0 = arith.constant 0 : i32
    %c0_i32_1 = arith.constant 0 : i32
    return %c0_i32, %c0_i32_0 : i32, i32
  }
  func.func @transform_6(%arg0: i32) -> (i32, i32) {
    %c0_i32 = arith.constant 0 : i32
    %c0_i32_0 = arith.constant 0 : i32
    %c0_i32_1 = arith.constant 0 : i32
    return %c0_i32, %c0_i32_0 : i32, i32
  }
  func.func @transform_7(%arg0: i32) -> (i32, i32) {
    %c0_i32 = arith.constant 0 : i32
    %c0_i32_0 = arith.constant 0 : i32
    %c0_i32_1 = arith.constant 0 : i32
    return %c0_i32, %c0_i32_0 : i32, i32
  }
  func.func @transform_8(%arg0: i32) -> (i32, i32) {
    %c0_i32 = arith.constant 0 : i32
    %c0_i32_0 = arith.constant 0 : i32
    %c0_i32_1 = arith.constant 0 : i32
    return %c0_i32, %c0_i32_0 : i32, i32
  }
  func.func @transform_9(%arg0: i32) -> (i32, i32) {
    %c0_i32 = arith.constant 0 : i32
    %c0_i32_0 = arith.constant 0 : i32
    %c0_i32_1 = arith.constant 0 : i32
    return %c0_i32, %c0_i32_0 : i32, i32
  }
  func.func @transform_10(%arg0: i32) -> (i32, i32) {
    %c0_i32 = arith.constant 0 : i32
    %c0_i32_0 = arith.constant 0 : i32
    %c0_i32_1 = arith.constant 0 : i32
    return %c0_i32, %c0_i32_0 : i32, i32
  }
  func.func @transform_11(%arg0: i32) -> (i32, i32) {
    %c0_i32 = arith.constant 0 : i32
    %c0_i32_0 = arith.constant 0 : i32
    return %arg0, %c0_i32 : i32, i32
  }
}

</mosaic_0001>

<llo_original>
// kernel: tpu_custom_call.1
$region0: #{tpu_custom_call.1}
  #allocation0 [shape = 'u32[]', space=smem, size = 0x4, offset = 0x4, fixed_abs, tag = 'smem constant byte address 0x4 - core index']
  #allocation1 [shape = 'u32[144,128]{1,0:T(1,128)}', space=vmem, size = 0x12000, scoped, tag = 'internal scratch']
  %s0 = inlined_call_operand.hbm [shape: f32[2,8,32], index: 0, kind: input, shape index: {}]
  %s1 = inlined_call_operand.vmem [shape: f32[32,8], index: 1, kind: input, shape index: {}]
  %s2 = inlined_call_operand.hbm [shape: f32[256,256], index: 2, kind: input, shape index: {}]
  %s3 = inlined_call_operand.vmem [shape: f32[32,96], index: 3, kind: input, shape index: {}]
  %s4 = inlined_call_operand.vmem [shape: f32[1,96], index: 4, kind: input, shape index: {}]
  %s5 = inlined_call_operand.hbm [shape: f32[32,32], index: 5, kind: input, shape index: {}]
  %s6 = inlined_call_operand.vmem [shape: f32[1,32], index: 6, kind: input, shape index: {}]
  %s7 = inlined_call_operand.hbm [shape: f32[1,32], index: 7, kind: input, shape index: {}]
  %s8 = inlined_call_operand.vmem [shape: f32[1,32], index: 8, kind: input, shape index: {}]
  %s9 = inlined_call_operand.vmem [shape: f32[32,32], index: 9, kind: input, shape index: {}]
  %s10 = inlined_call_operand.vmem [shape: f32[1,32], index: 10, kind: input, shape index: {}]
  %s11 = inlined_call_operand.vmem [shape: f32[64,32], index: 11, kind: output, shape index: {}]
  %s12 = sld [smem:[#allocation0]]
  $region70: #{tpu_custom_call.1} parent=0
    _
  %s14 = ssub.s32 1, %s12
  %s15 = scalar_select 0, %s14, %s12
  $region1: #{tpu_custom_call.1} parent=0
    #allocation2 [shape = 'u8[8192]{0}', space=vmem, size = 0x2000, scoped, tag = 'input window, operand 0, single buffered']
    #allocation3 [shape = 's32[1]{0}', space=sflag, size = 0x4, scoped, tag = 'scoped memory for tpu_custom_call.1']
    #allocation4 [shape = 'u8[262144]{0}', space=vmem, size = 0x40000, scoped, tag = 'input window, operand 2, single buffered']
    #allocation5 [shape = 's32[1]{0}', space=sflag, size = 0x4, scoped, tag = 'scoped memory for tpu_custom_call.1']
    #allocation6 [shape = 'u8[16384]{0}', space=vmem, size = 0x4000, scoped, tag = 'input window, operand 5, single buffered']
    #allocation7 [shape = 'u8[512]{0}', space=vmem, size = 0x400, scoped, tag = 'input window, operand 7, single buffered']
    #allocation8 [shape = 's32[1]{0}', space=sflag, size = 0x4, scoped, tag = 'scoped memory for tpu_custom_call.1']
    %16 = vsyncpa [#allocation3], 0
    %17 = vsyncpa [#allocation5], 0
    %18 = vsyncpa [#allocation8], 0
    // Predicated region
    $region2: #{tpu_custom_call.1} parent=1 // pred_check
      _
    $region3: #{tpu_custom_call.1} parent=1 // pred_check_branch
      %20 = sbr.rel (0) target = $region5
    $region4: #{tpu_custom_call.1} parent=1 // pred_region
      %s22 = ssub.s32 256, 256
      %23 = vsyncadd [#allocation3], %s22
      %s24 = sshll.u32 [#allocation2], 4
      %s25 = int_to_ptr.vmem [resolvable:$true] %s24
      %30 = dma.hbm_to_vmem [thread:$0]  %s0, 256, %s25, [#allocation3], 128, 128, 8
    $region5: #{tpu_custom_call.1} parent=1 // pred_fallthru
      _
    // Predicated region
    $region6: #{tpu_custom_call.1} parent=1 // pred_check
      _
    $region7: #{tpu_custom_call.1} parent=1 // pred_check_branch
      %32 = sbr.rel (0) target = $region9
    $region8: #{tpu_custom_call.1} parent=1 // pred_region
      _
    $region9: #{tpu_custom_call.1} parent=1 // pred_fallthru
      _
    // Predicated region
    $region10: #{tpu_custom_call.1} parent=1 // pred_check
      _
    $region11: #{tpu_custom_call.1} parent=1 // pred_check_branch
      %34 = sbr.rel (0) target = $region13
    $region12: #{tpu_custom_call.1} parent=1 // pred_region
      %s36 = ssub.s32 8192, 8192
      %37 = vsyncadd [#allocation5], %s36
      %s38 = sshll.u32 [#allocation4], 4
      %s39 = int_to_ptr.vmem [resolvable:$true] %s38
      %44 = dma.hbm_to_vmem [thread:$0]  %s2, 8192, %s39, [#allocation5], 256, 256, 16
    $region13: #{tpu_custom_call.1} parent=1 // pred_fallthru
      _
    // Predicated region
    $region14: #{tpu_custom_call.1} parent=1 // pred_check
      _
    $region15: #{tpu_custom_call.1} parent=1 // pred_check_branch
      %46 = sbr.rel (0) target = $region17
    $region16: #{tpu_custom_call.1} parent=1 // pred_region
      _
    $region17: #{tpu_custom_call.1} parent=1 // pred_fallthru
      _
    // Predicated region
    $region18: #{tpu_custom_call.1} parent=1 // pred_check
      _
    $region19: #{tpu_custom_call.1} parent=1 // pred_check_branch
      %48 = sbr.rel (0) target = $region21
    $region20: #{tpu_custom_call.1} parent=1 // pred_region
      _
    $region21: #{tpu_custom_call.1} parent=1 // pred_fallthru
      _
    // Predicated region
    $region22: #{tpu_custom_call.1} parent=1 // pred_check
      _
    $region23: #{tpu_custom_call.1} parent=1 // pred_check_branch
      %50 = sbr.rel (0) target = $region25
    $region24: #{tpu_custom_call.1} parent=1 // pred_region
      %s52 = ssub.s32 512, 512
      %53 = vsyncadd [#allocation5], %s52
      %s54 = sshll.u32 [#allocation6], 4
      %s55 = int_to_ptr.vmem [resolvable:$true] %s54
      %60 = dma.hbm_to_vmem [thread:$0]  %s5, 512, %s55, [#allocation5], 128, 128, 8
    $region25: #{tpu_custom_call.1} parent=1 // pred_fallthru
      _
    // Predicated region
    $region26: #{tpu_custom_call.1} parent=1 // pred_check
      _
    $region27: #{tpu_custom_call.1} parent=1 // pred_check_branch
      %62 = sbr.rel (0) target = $region29
    $region28: #{tpu_custom_call.1} parent=1 // pred_region
      _
    $region29: #{tpu_custom_call.1} parent=1 // pred_fallthru
      _
    // Predicated region
    $region30: #{tpu_custom_call.1} parent=1 // pred_check
      _
    $region31: #{tpu_custom_call.1} parent=1 // pred_check_branch
      %64 = sbr.rel (0) target = $region33
    $region32: #{tpu_custom_call.1} parent=1 // pred_region
      %s66 = ssub.s32 16, 16
      %67 = vsyncadd [#allocation8], %s66
      %s69 = sshll.u32 [#allocation7], 4
      %s70 = int_to_ptr.vmem [resolvable:$true] %s69
      %72 = dma.hbm_to_vmem [thread:$0]  %s7, 16, %s70, [#allocation8]
    $region33: #{tpu_custom_call.1} parent=1 // pred_fallthru
      _
    // Predicated region
    $region34: #{tpu_custom_call.1} parent=1 // pred_check
      _
    $region35: #{tpu_custom_call.1} parent=1 // pred_check_branch
      %74 = sbr.rel (0) target = $region37
    $region36: #{tpu_custom_call.1} parent=1 // pred_region
      _
    $region37: #{tpu_custom_call.1} parent=1 // pred_fallthru
      _
    // Predicated region
    $region38: #{tpu_custom_call.1} parent=1 // pred_check
      _
    $region39: #{tpu_custom_call.1} parent=1 // pred_check_branch
      %76 = sbr.rel (0) target = $region41
    $region40: #{tpu_custom_call.1} parent=1 // pred_region
      _
    $region41: #{tpu_custom_call.1} parent=1 // pred_fallthru
      _
    // Predicated region
    $region42: #{tpu_custom_call.1} parent=1 // pred_check
      _
    $region43: #{tpu_custom_call.1} parent=1 // pred_check_branch
      %78 = sbr.rel (0) target = $region45
    $region44: #{tpu_custom_call.1} parent=1 // pred_region
      _
    $region45: #{tpu_custom_call.1} parent=1 // pred_fallthru
      _
    // Predicated region
    $region46: #{tpu_custom_call.1} parent=1 // pred_check
      _
    $region47: #{tpu_custom_call.1} parent=1 // pred_check_branch
      %80 = sbr.rel (0) target = $region49
    $region48: #{tpu_custom_call.1} parent=1 // pred_region
      %81 = dma.done [#allocation3], 256
    $region49: #{tpu_custom_call.1} parent=1 // pred_fallthru
      _
    // Predicated region
    $region50: #{tpu_custom_call.1} parent=1 // pred_check
      _
    $region51: #{tpu_custom_call.1} parent=1 // pred_check_branch
      %83 = sbr.rel (0) target = $region53
    $region52: #{tpu_custom_call.1} parent=1 // pred_region
      %84 = dma.done [#allocation5], 8192
    $region53: #{tpu_custom_call.1} parent=1 // pred_fallthru
      _
    // Predicated region
    $region54: #{tpu_custom_call.1} parent=1 // pred_check
      _
    $region55: #{tpu_custom_call.1} parent=1 // pred_check_branch
      %86 = sbr.rel (0) target = $region57
    $region56: #{tpu_custom_call.1} parent=1 // pred_region
      %87 = dma.done [#allocation5], 512
    $region57: #{tpu_custom_call.1} parent=1 // pred_fallthru
      _
    // Predicated region
    $region58: #{tpu_custom_call.1} parent=1 // pred_check
      _
    $region59: #{tpu_custom_call.1} parent=1 // pred_check_branch
      %89 = sbr.rel (0) target = $region61
    $region60: #{tpu_custom_call.1} parent=1 // pred_region
      %90 = dma.done [#allocation8], 16
    $region61: #{tpu_custom_call.1} parent=1 // pred_fallthru
      _
    %v91 = vld [vmem:[%s1] sm:$0xff]
    %v92 = vld [vmem:[%s1 + $0x8] sm:$0xff]
    %v93 = vld [vmem:[%s1 + $0x10] sm:$0xff]
    %v94 = vld [vmem:[%s1 + $0x18] sm:$0xff]
    %v95 = vld [vmem:[#allocation2] sm:$0xff]
    %vm96 = vcmask 64512
    %v98 = vsel %vm96, %v91, 0
    %v101 = vsel %vm96, %v92, 0
    %v104 = vsel %vm96, %v93, 0
    %v107 = vsel %vm96, %v94, 0
    %109 = vmatprep.subr.mxu0 0.0
    %110 = vmatpush1.msra.mxu0 %v95
    %111 = vmatprep.subr.mxu0 0.0
    %112 = vmatpush1.msra.mxu0 0.0
    %113 = vmatprep.subr.mxu0 0.0
    %114 = vmatpush1.msra.mxu0 0.0
    %115 = vmatprep.subr.mxu0 0.0
    %116 = vmatpush1.msra.mxu0 0.0
    %117 = vmatprep.subr.mxu0 0.0
    %118 = vmatpush1.msra.mxu0 0.0
    %119 = vmatprep.subr.mxu0 0.0
    %120 = vmatpush1.msra.mxu0 0.0
    %121 = vmatprep.subr.mxu0 0.0
    %122 = vmatpush1.msra.mxu0 0.0
    %123 = vmatprep.subr.mxu0 0.0
    %124 = vmatpush1.msra.mxu0 0.0
    %125 = vmatprep.subr.mxu0 0.0
    %126 = vmatpush1.msra.mxu0 0.0
    %127 = vmatprep.subr.mxu0 0.0
    %128 = vmatpush1.msra.mxu0 0.0
    %129 = vmatprep.subr.mxu0 0.0
    %130 = vmatpush1.msra.mxu0 0.0
    %131 = vmatprep.subr.mxu0 0.0
    %132 = vmatpush1.msra.mxu0 0.0
    %133 = vmatprep.subr.mxu0 0.0
    %134 = vmatpush1.msra.mxu0 0.0
    %135 = vmatprep.subr.mxu0 0.0
    %136 = vmatpush1.msra.mxu0 0.0
    %137 = vmatprep.subr.mxu0 0.0
    %138 = vmatpush1.msra.mxu0 0.0
    %139 = vmatprep.subr.mxu0 0.0
    %140 = vmatpush1.msra.mxu0 0.0
    %141 = vmatprep.subr.mxu0 0.0
    %142 = vmatpush1.msra.mxu0 0.0
    %143 = vmatprep.subr.mxu0 0.0
    %144 = vmatpush1.msra.mxu0 0.0
    %145 = vmatprep.subr.mxu0 0.0
    %146 = vmatpush1.msra.mxu0 0.0
    %147 = vmatprep.subr.mxu0 0.0
    %148 = vmatpush1.msra.mxu0 0.0
    %149 = vmatprep.subr.mxu0 0.0
    %150 = vmatpush1.msra.mxu0 0.0
    %151 = vmatprep.subr.mxu0 0.0
    %152 = vmatpush1.msra.mxu0 0.0
    %153 = vmatprep.subr.mxu0 0.0
    %154 = vmatpush1.msra.mxu0 0.0
    %155 = vmatprep.subr.mxu0 0.0
    %156 = vmatpush1.msra.mxu0 0.0
    %157 = vmatprep.subr.mxu0 0.0
    %158 = vmatpush1.msra.mxu0 0.0
    %159 = vmatprep.subr.mxu0 0.0
    %160 = vmatpush1.msra.mxu0 0.0
    %161 = vmatprep.subr.mxu0 0.0
    %162 = vmatpush1.msra.mxu0 0.0
    %163 = vmatprep.subr.mxu0 0.0
    %164 = vmatpush1.msra.mxu0 0.0
    %165 = vmatprep.subr.mxu0 0.0
    %166 = vmatpush1.msra.mxu0 0.0
    %167 = vmatprep.subr.mxu0 0.0
    %168 = vmatpush1.msra.mxu0 0.0
    %169 = vmatprep.subr.mxu0 0.0
    %170 = vmatpush1.msra.mxu0 0.0
    %171 = vmatprep.subr.mxu0 0.0
    %172 = vmatpush1.msra.mxu0 0.0
    %173 = vmatprep.mubr.f32.mxu0 0.0
    %174 = vmatmul.mubr.f32.gmra.mrb[0].mxu0 %v98
    %v175 = vpop.f32.mrb[0].mxu0
    %v176 = vadd.f32 0.0, %v175
    %v177 = vpop.f32.mrb[0].mxu0
    %178 = vmatprep.mubr.f32.mxu0 0.0
    %179 = vmatmul.mubr.f32.gmra.mrb[0].mxu0 %v101
    %v180 = vpop.f32.mrb[0].mxu0
    %v181 = vadd.f32 0.0, %v180
    %v182 = vpop.f32.mrb[0].mxu0
    %183 = vmatprep.mubr.f32.mxu0 0.0
    %184 = vmatmul.mubr.f32.gmra.mrb[0].mxu0 %v104
    %v185 = vpop.f32.mrb[0].mxu0
    %v186 = vadd.f32 0.0, %v185
    %v187 = vpop.f32.mrb[0].mxu0
    %188 = vmatprep.mubr.f32.mxu0 0.0
    %189 = vmatmul.mubr.f32.gmra.mrb[0].mxu0 %v107
    %v190 = vpop.f32.mrb[0].mxu0
    %v191 = vadd.f32 0.0, %v190
    %v192 = vpop.f32.mrb[0].mxu0
    %193 = vdwg.mxu0
    %s194 = scalar_lea.vmem [#allocation2], 8
    %v195 = vld [vmem:[%s194] sm:$0xff]
    %196 = vmatprep.subr.mxu0 0.0
    %197 = vmatpush1.msra.mxu0 %v195
    %198 = vmatprep.subr.mxu0 0.0
    %199 = vmatpush1.msra.mxu0 0.0
    %200 = vmatprep.subr.mxu0 0.0
    %201 = vmatpush1.msra.mxu0 0.0
    %202 = vmatprep.subr.mxu0 0.0
    %203 = vmatpush1.msra.mxu0 0.0
    %204 = vmatprep.subr.mxu0 0.0
    %205 = vmatpush1.msra.mxu0 0.0
    %206 = vmatprep.subr.mxu0 0.0
    %207 = vmatpush1.msra.mxu0 0.0
    %208 = vmatprep.subr.mxu0 0.0
    %209 = vmatpush1.msra.mxu0 0.0
    %210 = vmatprep.subr.mxu0 0.0
    %211 = vmatpush1.msra.mxu0 0.0
    %212 = vmatprep.subr.mxu0 0.0
    %213 = vmatpush1.msra.mxu0 0.0
    %214 = vmatprep.subr.mxu0 0.0
    %215 = vmatpush1.msra.mxu0 0.0
    %216 = vmatprep.subr.mxu0 0.0
    %217 = vmatpush1.msra.mxu0 0.0
    %218 = vmatprep.subr.mxu0 0.0
    %219 = vmatpush1.msra.mxu0 0.0
    %220 = vmatprep.subr.mxu0 0.0
    %221 = vmatpush1.msra.mxu0 0.0
    %222 = vmatprep.subr.mxu0 0.0
    %223 = vmatpush1.msra.mxu0 0.0
    %224 = vmatprep.subr.mxu0 0.0
    %225 = vmatpush1.msra.mxu0 0.0
    %226 = vmatprep.subr.mxu0 0.0
    %227 = vmatpush1.msra.mxu0 0.0
    %228 = vmatprep.subr.mxu0 0.0
    %229 = vmatpush1.msra.mxu0 0.0
    %230 = vmatprep.subr.mxu0 0.0
    %231 = vmatpush1.msra.mxu0 0.0
    %232 = vmatprep.subr.mxu0 0.0
    %233 = vmatpush1.msra.mxu0 0.0
    %234 = vmatprep.subr.mxu0 0.0
    %235 = vmatpush1.msra.mxu0 0.0
    %236 = vmatprep.subr.mxu0 0.0
    %237 = vmatpush1.msra.mxu0 0.0
    %238 = vmatprep.subr.mxu0 0.0
    %239 = vmatpush1.msra.mxu0 0.0
    %240 = vmatprep.subr.mxu0 0.0
    %241 = vmatpush1.msra.mxu0 0.0
    %242 = vmatprep.subr.mxu0 0.0
    %243 = vmatpush1.msra.mxu0 0.0
    %244 = vmatprep.subr.mxu0 0.0
    %245 = vmatpush1.msra.mxu0 0.0
    %246 = vmatprep.subr.mxu0 0.0
    %247 = vmatpush1.msra.mxu0 0.0
    %248 = vmatprep.subr.mxu0 0.0
    %249 = vmatpush1.msra.mxu0 0.0
    %250 = vmatprep.subr.mxu0 0.0
    %251 = vmatpush1.msra.mxu0 0.0
    %252 = vmatprep.subr.mxu0 0.0
    %253 = vmatpush1.msra.mxu0 0.0
    %254 = vmatprep.subr.mxu0 0.0
    %255 = vmatpush1.msra.mxu0 0.0
    %256 = vmatprep.subr.mxu0 0.0
    %257 = vmatpush1.msra.mxu0 0.0
    %258 = vmatprep.subr.mxu0 0.0
    %259 = vmatpush1.msra.mxu0 0.0
    %260 = vmatprep.mubr.f32.mxu0 0.0
    %261 = vmatmul.mubr.f32.gmra.mrb[0].mxu0 %v98
    %v262 = vpop.f32.mrb[0].mxu0
    %v263 = vadd.f32 0.0, %v262
    %v264 = vpop.f32.mrb[0].mxu0
    %265 = vmatprep.mubr.f32.mxu0 0.0
    %266 = vmatmul.mubr.f32.gmra.mrb[0].mxu0 %v101
    %v267 = vpop.f32.mrb[0].mxu0
    %v268 = vadd.f32 0.0, %v267
    %v269 = vpop.f32.mrb[0].mxu0
    %270 = vmatprep.mubr.f32.mxu0 0.0
    %271 = vmatmul.mubr.f32.gmra.mrb[0].mxu0 %v104
    %v272 = vpop.f32.mrb[0].mxu0
    %v273 = vadd.f32 0.0, %v272
    %v274 = vpop.f32.mrb[0].mxu0
    %275 = vmatprep.mubr.f32.mxu0 0.0
    %276 = vmatmul.mubr.f32.gmra.mrb[0].mxu0 %v107
    %v277 = vpop.f32.mrb[0].mxu0
    %v278 = vadd.f32 0.0, %v277
    %v279 = vpop.f32.mrb[0].mxu0
    %280 = vdwg.mxu0
    %v281 = vld [vmem:[%s3] sm:$0xff]
    %v282 = vld [vmem:[%s3 + $0x8] sm:$0xff]
    %v283 = vld [vmem:[%s3 + $0x10] sm:$0xff]
    %v284 = vld [vmem:[%s3 + $0x18] sm:$0xff]
    %v285 = vld [vmem:[%s4] sm:$0x1]
    %v287 = vlaneseq
    %v288 = vshrl.u32 %v287, 7
    %v289 = vsub.s32 0, %v288
    %v290 = vrot.slane %v285, %v289
    %vm292 = vcmask 261120
    %v294 = vsel %vm292, %v176, 0
    %v297 = vsel %vm292, %v181, 0
    %v300 = vsel %vm292, %v186, 0
    %v303 = vsel %vm292, %v191, 0
    %v306 = vsel %vm292, %v263, 0
    %v309 = vsel %vm292, %v268, 0
    %v312 = vsel %vm292, %v273, 0
    %v315 = vsel %vm292, %v278, 0
    %317 = vmatprep.subr.mxu0 0.0
    %318 = vmatpush1.msra.mxu0 %v281
    %319 = vmatprep.subr.mxu0 0.0
    %320 = vmatpush1.msra.mxu0 %v282
    %321 = vmatprep.subr.mxu0 0.0
    %322 = vmatpush1.msra.mxu0 %v283
    %323 = vmatprep.subr.mxu0 0.0
    %324 = vmatpush1.msra.mxu0 %v284
    %325 = vmatprep.subr.mxu0 0.0
    %326 = vmatpush1.msra.mxu0 0.0
    %327 = vmatprep.subr.mxu0 0.0
    %328 = vmatpush1.msra.mxu0 0.0
    %329 = vmatprep.subr.mxu0 0.0
    %330 = vmatpush1.msra.mxu0 0.0
    %331 = vmatprep.subr.mxu0 0.0
    %332 = vmatpush1.msra.mxu0 0.0
    %333 = vmatprep.subr.mxu0 0.0
    %334 = vmatpush1.msra.mxu0 0.0
    %335 = vmatprep.subr.mxu0 0.0
    %336 = vmatpush1.msra.mxu0 0.0
    %337 = vmatprep.subr.mxu0 0.0
    %338 = vmatpush1.msra.mxu0 0.0
    %339 = vmatprep.subr.mxu0 0.0
    %340 = vmatpush1.msra.mxu0 0.0
    %341 = vmatprep.subr.mxu0 0.0
    %342 = vmatpush1.msra.mxu0 0.0
    %343 = vmatprep.subr.mxu0 0.0
    %344 = vmatpush1.msra.mxu0 0.0
    %345 = vmatprep.subr.mxu0 0.0
    %346 = vmatpush1.msra.mxu0 0.0
    %347 = vmatprep.subr.mxu0 0.0
    %348 = vmatpush1.msra.mxu0 0.0
    %349 = vmatprep.subr.mxu0 0.0
    %350 = vmatpush1.msra.mxu0 0.0
    %351 = vmatprep.subr.mxu0 0.0
    %352 = vmatpush1.msra.mxu0 0.0
    %353 = vmatprep.subr.mxu0 0.0
    %354 = vmatpush1.msra.mxu0 0.0
    %355 = vmatprep.subr.mxu0 0.0
    %356 = vmatpush1.msra.mxu0 0.0
    %357 = vmatprep.subr.mxu0 0.0
    %358 = vmatpush1.msra.mxu0 0.0
    %359 = vmatprep.subr.mxu0 0.0
    %360 = vmatpush1.msra.mxu0 0.0
    %361 = vmatprep.subr.mxu0 0.0
    %362 = vmatpush1.msra.mxu0 0.0
    %363 = vmatprep.subr.mxu0 0.0
    %364 = vmatpush1.msra.mxu0 0.0
    %365 = vmatprep.subr.mxu0 0.0
    %366 = vmatpush1.msra.mxu0 0.0
    %367 = vmatprep.subr.mxu0 0.0
    %368 = vmatpush1.msra.mxu0 0.0
    %369 = vmatprep.subr.mxu0 0.0
    %370 = vmatpush1.msra.mxu0 0.0
    %371 = vmatprep.subr.mxu0 0.0
    %372 = vmatpush1.msra.mxu0 0.0
    %373 = vmatprep.subr.mxu0 0.0
    %374 = vmatpush1.msra.mxu0 0.0
    %375 = vmatprep.subr.mxu0 0.0
    %376 = vmatpush1.msra.mxu0 0.0
    %377 = vmatprep.subr.mxu0 0.0
    %378 = vmatpush1.msra.mxu0 0.0
    %379 = vmatprep.subr.mxu0 0.0
    %380 = vmatpush1.msra.mxu0 0.0
    %381 = vmatprep.mubr.f32.mxu0 0.0
    %382 = vmatmul.mubr.f32.gmra.mrb[0].mxu0 %v294
    %v383 = vpop.f32.mrb[0].mxu0
    %v384 = vadd.f32 %v290, %v383
    %v385 = vpop.f32.mrb[0].mxu0
    %386 = vmatprep.mubr.f32.mxu0 0.0
    %387 = vmatmul.mubr.f32.gmra.mrb[0].mxu0 %v297
    %v388 = vpop.f32.mrb[0].mxu0
    %v389 = vadd.f32 %v290, %v388
    %v390 = vpop.f32.mrb[0].mxu0
    %391 = vmatprep.mubr.f32.mxu0 0.0
    %392 = vmatmul.mubr.f32.gmra.mrb[0].mxu0 %v300
    %v393 = vpop.f32.mrb[0].mxu0
    %v394 = vadd.f32 %v290, %v393
    %v395 = vpop.f32.mrb[0].mxu0
    %396 = vmatprep.mubr.f32.mxu0 0.0
    %397 = vmatmul.mubr.f32.gmra.mrb[0].mxu0 %v303
    %v398 = vpop.f32.mrb[0].mxu0
    %v399 = vadd.f32 %v290, %v398
    %v400 = vpop.f32.mrb[0].mxu0
    %401 = vmatprep.mubr.f32.mxu0 0.0
    %402 = vmatmul.mubr.f32.gmra.mrb[0].mxu0 %v306
    %v403 = vpop.f32.mrb[0].mxu0
    %v404 = vadd.f32 %v290, %v403
    %v405 = vpop.f32.mrb[0].mxu0
    %406 = vmatprep.mubr.f32.mxu0 0.0
    %407 = vmatmul.mubr.f32.gmra.mrb[0].mxu0 %v309
    %v408 = vpop.f32.mrb[0].mxu0
    %v409 = vadd.f32 %v290, %v408
    %v410 = vpop.f32.mrb[0].mxu0
    %411 = vmatprep.mubr.f32.mxu0 0.0
    %412 = vmatmul.mubr.f32.gmra.mrb[0].mxu0 %v312
    %v413 = vpop.f32.mrb[0].mxu0
    %v414 = vadd.f32 %v290, %v413
    %v415 = vpop.f32.mrb[0].mxu0
    %416 = vmatprep.mubr.f32.mxu0 0.0
    %417 = vmatmul.mubr.f32.gmra.mrb[0].mxu0 %v315
    %v418 = vpop.f32.mrb[0].mxu0
    %v419 = vadd.f32 %v290, %v418
    %v420 = vpop.f32.mrb[0].mxu0
    %421 = vdwg.mxu0
    %426 = vrot.lane.b32.xlu0 %v384, 120
    %v427 = vpop.permute.xlu0 %426
    %428 = vrot.lane.b32.xlu0 %v389, 120
    %v429 = vpop.permute.xlu0 %428
    %430 = vrot.lane.b32.xlu0 %v394, 120
    %v431 = vpop.permute.xlu0 %430
    %432 = vrot.lane.b32.xlu0 %v399, 120
    %v433 = vpop.permute.xlu0 %432
    %434 = vrot.lane.b32.xlu0 %v384, 112
    %v435 = vpop.permute.xlu0 %434
    %436 = vrot.lane.b32.xlu0 %v389, 112
    %v437 = vpop.permute.xlu0 %436
    %438 = vrot.lane.b32.xlu0 %v394, 112
    %v439 = vpop.permute.xlu0 %438
    %440 = vrot.lane.b32.xlu0 %v399, 112
    %v441 = vpop.permute.xlu0 %440
    %442 = vrot.lane.b32.xlu0 %v384, 104
    %v443 = vpop.permute.xlu0 %442
    %444 = vrot.lane.b32.xlu0 %v389, 104
    %v445 = vpop.permute.xlu0 %444
    %446 = vrot.lane.b32.xlu0 %v394, 104
    %v447 = vpop.permute.xlu0 %446
    %448 = vrot.lane.b32.xlu0 %v399, 104
    %v449 = vpop.permute.xlu0 %448
    %454 = vrot.lane.b32.xlu0 %v404, 120
    %v455 = vpop.permute.xlu0 %454
    %456 = vrot.lane.b32.xlu0 %v409, 120
    %v457 = vpop.permute.xlu0 %456
    %458 = vrot.lane.b32.xlu0 %v414, 120
    %v459 = vpop.permute.xlu0 %458
    %460 = vrot.lane.b32.xlu0 %v419, 120
    %v461 = vpop.permute.xlu0 %460
    %462 = vrot.lane.b32.xlu0 %v404, 112
    %v463 = vpop.permute.xlu0 %462
    %464 = vrot.lane.b32.xlu0 %v409, 112
    %v465 = vpop.permute.xlu0 %464
    %466 = vrot.lane.b32.xlu0 %v414, 112
    %v467 = vpop.permute.xlu0 %466
    %468 = vrot.lane.b32.xlu0 %v419, 112
    %v469 = vpop.permute.xlu0 %468
    %470 = vrot.lane.b32.xlu0 %v404, 104
    %v471 = vpop.permute.xlu0 %470
    %472 = vrot.lane.b32.xlu0 %v409, 104
    %v473 = vpop.permute.xlu0 %472
    %474 = vrot.lane.b32.xlu0 %v414, 104
    %v475 = vpop.permute.xlu0 %474
    %476 = vrot.lane.b32.xlu0 %v419, 104
    %v477 = vpop.permute.xlu0 %476
    %v478 = vld [vmem:[#allocation4] sm:$0xff]
    %v479 = vld [vmem:[#allocation4 + $0x8] sm:$0xff]
    %v480 = vld [vmem:[#allocation4 + $0x10] sm:$0xff]
    %v481 = vld [vmem:[#allocation4 + $0x18] sm:$0xff]
    %v482 = vld [vmem:[#allocation4 + $0x20] sm:$0xff]
    %v483 = vld [vmem:[#allocation4 + $0x28] sm:$0xff]
    %v484 = vld [vmem:[#allocation4 + $0x30] sm:$0xff]
    %v485 = vld [vmem:[#allocation4 + $0x38] sm:$0xff]
    %v486 = vld [vmem:[#allocation4 + $0x40] sm:$0xff]
    %v487 = vld [vmem:[#allocation4 + $0x48] sm:$0xff]
    %v488 = vld [vmem:[#allocation4 + $0x50] sm:$0xff]
    %v489 = vld [vmem:[#allocation4 + $0x58] sm:$0xff]
    %v490 = vld [vmem:[#allocation4 + $0x60] sm:$0xff]
    %v491 = vld [vmem:[#allocation4 + $0x68] sm:$0xff]
    %v492 = vld [vmem:[#allocation4 + $0x70] sm:$0xff]
    %v493 = vld [vmem:[#allocation4 + $0x78] sm:$0xff]
    %v494 = vld [vmem:[#allocation4 + $0x80] sm:$0xff]
    %v495 = vld [vmem:[#allocation4 + $0x88] sm:$0xff]
    %v496 = vld [vmem:[#allocation4 + $0x90] sm:$0xff]
    %v497 = vld [vmem:[#allocation4 + $0x98] sm:$0xff]
    %v498 = vld [vmem:[#allocation4 + $0xa0] sm:$0xff]
    %v499 = vld [vmem:[#allocation4 + $0xa8] sm:$0xff]
    %v500 = vld [vmem:[#allocation4 + $0xb0] sm:$0xff]
    %v501 = vld [vmem:[#allocation4 + $0xb8] sm:$0xff]
    %v502 = vld [vmem:[#allocation4 + $0xc0] sm:$0xff]
    %v503 = vld [vmem:[#allocation4 + $0xc8] sm:$0xff]
    %v504 = vld [vmem:[#allocation4 + $0xd0] sm:$0xff]
    %v505 = vld [vmem:[#allocation4 + $0xd8] sm:$0xff]
    %v506 = vld [vmem:[#allocation4 + $0xe0] sm:$0xff]
    %v507 = vld [vmem:[#allocation4 + $0xe8] sm:$0xff]
    %v508 = vld [vmem:[#allocation4 + $0xf0] sm:$0xff]
    %v509 = vld [vmem:[#allocation4 + $0xf8] sm:$0xff]
    %v510 = vld [vmem:[#allocation4 + $0x100] sm:$0xff]
    %v511 = vld [vmem:[#allocation4 + $0x108] sm:$0xff]
    %v512 = vld [vmem:[#allocation4 + $0x110] sm:$0xff]
    %v513 = vld [vmem:[#allocation4 + $0x118] sm:$0xff]
    %v514 = vld [vmem:[#allocation4 + $0x120] sm:$0xff]
    %v515 = vld [vmem:[#allocation4 + $0x128] sm:$0xff]
    %v516 = vld [vmem:[#allocation4 + $0x130] sm:$0xff]
    %v517 = vld [vmem:[#allocation4 + $0x138] sm:$0xff]
    %v518 = vld [vmem:[#allocation4 + $0x140] sm:$0xff]
    %v519 = vld [vmem:[#allocation4 + $0x148] sm:$0xff]
    %v520 = vld [vmem:[#allocation4 + $0x150] sm:$0xff]
    %v521 = vld [vmem:[#allocation4 + $0x158] sm:$0xff]
    %v522 = vld [vmem:[#allocation4 + $0x160] sm:$0xff]
    %v523 = vld [vmem:[#allocation4 + $0x168] sm:$0xff]
    %v524 = vld [vmem:[#allocation4 + $0x170] sm:$0xff]
    %v525 = vld [vmem:[#allocation4 + $0x178] sm:$0xff]
    %v526 = vld [vmem:[#allocation4 + $0x180] sm:$0xff]
    %v527 = vld [vmem:[#allocation4 + $0x188] sm:$0xff]
    %v528 = vld [vmem:[#allocation4 + $0x190] sm:$0xff]
    %v529 = vld [vmem:[#allocation4 + $0x198] sm:$0xff]
    %v530 = vld [vmem:[#allocation4 + $0x1a0] sm:$0xff]
    %v531 = vld [vmem:[#allocation4 + $0x1a8] sm:$0xff]
    %v532 = vld [vmem:[#allocation4 + $0x1b0] sm:$0xff]
    %v533 = vld [vmem:[#allocation4 + $0x1b8] sm:$0xff]
    %v534 = vld [vmem:[#allocation4 + $0x1c0] sm:$0xff]
    %v535 = vld [vmem:[#allocation4 + $0x1c8] sm:$0xff]
    %v536 = vld [vmem:[#allocation4 + $0x1d0] sm:$0xff]
    %v537 = vld [vmem:[#allocation4 + $0x1d8] sm:$0xff]
    %v538 = vld [vmem:[#allocation4 + $0x1e0] sm:$0xff]
    %v539 = vld [vmem:[#allocation4 + $0x1e8] sm:$0xff]
    %v540 = vld [vmem:[#allocation4 + $0x1f0] sm:$0xff]
    %v541 = vld [vmem:[#allocation4 + $0x1f8] sm:$0xff]
    %542 = vrot.lane.b32.xlu0 %v384, 96
    %v543 = vpop.permute.xlu0 %542
    %544 = vrot.lane.b32.xlu0 %v389, 96
    %v545 = vpop.permute.xlu0 %544
    %546 = vrot.lane.b32.xlu0 %v394, 96
    %v547 = vpop.permute.xlu0 %546
    %548 = vrot.lane.b32.xlu0 %v399, 96
    %v549 = vpop.permute.xlu0 %548
    %550 = vrot.lane.b32.xlu0 %v427, 96
    %v551 = vpop.permute.xlu0 %550
    %552 = vrot.lane.b32.xlu0 %v429, 96
    %v553 = vpop.permute.xlu0 %552
    %554 = vrot.lane.b32.xlu0 %v431, 96
    %v555 = vpop.permute.xlu0 %554
    %556 = vrot.lane.b32.xlu0 %v433, 96
    %v557 = vpop.permute.xlu0 %556
    %558 = vrot.lane.b32.xlu0 %v435, 96
    %v559 = vpop.permute.xlu0 %558
    %560 = vrot.lane.b32.xlu0 %v437, 96
    %v561 = vpop.permute.xlu0 %560
    %562 = vrot.lane.b32.xlu0 %v439, 96
    %v563 = vpop.permute.xlu0 %562
    %564 = vrot.lane.b32.xlu0 %v441, 96
    %v565 = vpop.permute.xlu0 %564
    %566 = vrot.lane.b32.xlu0 %v443, 96
    %v567 = vpop.permute.xlu0 %566
    %568 = vrot.lane.b32.xlu0 %v445, 96
    %v569 = vpop.permute.xlu0 %568
    %570 = vrot.lane.b32.xlu0 %v447, 96
    %v571 = vpop.permute.xlu0 %570
    %572 = vrot.lane.b32.xlu0 %v449, 96
    %v573 = vpop.permute.xlu0 %572
    %574 = vrot.lane.b32.xlu0 %v404, 96
    %v575 = vpop.permute.xlu0 %574
    %576 = vrot.lane.b32.xlu0 %v409, 96
    %v577 = vpop.permute.xlu0 %576
    %578 = vrot.lane.b32.xlu0 %v414, 96
    %v579 = vpop.permute.xlu0 %578
    %580 = vrot.lane.b32.xlu0 %v419, 96
    %v581 = vpop.permute.xlu0 %580
    %582 = vrot.lane.b32.xlu0 %v455, 96
    %v583 = vpop.permute.xlu0 %582
    %584 = vrot.lane.b32.xlu0 %v457, 96
    %v585 = vpop.permute.xlu0 %584
    %586 = vrot.lane.b32.xlu0 %v459, 96
    %v587 = vpop.permute.xlu0 %586
    %588 = vrot.lane.b32.xlu0 %v461, 96
    %v589 = vpop.permute.xlu0 %588
    %590 = vrot.lane.b32.xlu0 %v463, 96
    %v591 = vpop.permute.xlu0 %590
    %592 = vrot.lane.b32.xlu0 %v465, 96
    %v593 = vpop.permute.xlu0 %592
    %594 = vrot.lane.b32.xlu0 %v467, 96
    %v595 = vpop.permute.xlu0 %594
    %596 = vrot.lane.b32.xlu0 %v469, 96
    %v597 = vpop.permute.xlu0 %596
    %598 = vrot.lane.b32.xlu0 %v471, 96
    %v599 = vpop.permute.xlu0 %598
    %600 = vrot.lane.b32.xlu0 %v473, 96
    %v601 = vpop.permute.xlu0 %600
    %602 = vrot.lane.b32.xlu0 %v475, 96
    %v603 = vpop.permute.xlu0 %602
    %604 = vrot.lane.b32.xlu0 %v477, 96
    %v605 = vpop.permute.xlu0 %604
    %v606 = vsel %vm96, %v384, 0
    %v608 = vsel %vm96, %v389, 0
    %v610 = vsel %vm96, %v394, 0
    %v612 = vsel %vm96, %v399, 0
    %v614 = vsel %vm96, %v427, 0
    %v616 = vsel %vm96, %v429, 0
    %v618 = vsel %vm96, %v431, 0
    %v620 = vsel %vm96, %v433, 0
    %v622 = vsel %vm96, %v435, 0
    %v624 = vsel %vm96, %v437, 0
    %v626 = vsel %vm96, %v439, 0
    %v628 = vsel %vm96, %v441, 0
    %v630 = vsel %vm96, %v443, 0
    %v632 = vsel %vm96, %v445, 0
    %v634 = vsel %vm96, %v447, 0
    %v636 = vsel %vm96, %v449, 0
    %v638 = vsel %vm96, %v404, 0
    %v640 = vsel %vm96, %v409, 0
    %v642 = vsel %vm96, %v414, 0
    %v644 = vsel %vm96, %v419, 0
    %v646 = vsel %vm96, %v455, 0
    %v648 = vsel %vm96, %v457, 0
    %v650 = vsel %vm96, %v459, 0
    %v652 = vsel %vm96, %v461, 0
    %v654 = vsel %vm96, %v463, 0
    %v656 = vsel %vm96, %v465, 0
    %v658 = vsel %vm96, %v467, 0
    %v660 = vsel %vm96, %v469, 0
    %v662 = vsel %vm96, %v471, 0
    %v664 = vsel %vm96, %v473, 0
    %v666 = vsel %vm96, %v475, 0
    %v668 = vsel %vm96, %v477, 0
    %v670 = vsel %vm96, %v543, 0
    %v672 = vsel %vm96, %v545, 0
    %v674 = vsel %vm96, %v547, 0
    %v676 = vsel %vm96, %v549, 0
    %v678 = vsel %vm96, %v551, 0
    %v680 = vsel %vm96, %v553, 0
    %v682 = vsel %vm96, %v555, 0
    %v684 = vsel %vm96, %v557, 0
    %v686 = vsel %vm96, %v559, 0
    %v688 = vsel %vm96, %v561, 0
    %v690 = vsel %vm96, %v563, 0
    %v692 = vsel %vm96, %v565, 0
    %v694 = vsel %vm96, %v567, 0
    %v696 = vsel %vm96, %v569, 0
    %v698 = vsel %vm96, %v571, 0
    %v700 = vsel %vm96, %v573, 0
    %v702 = vsel %vm96, %v575, 0
    %v704 = vsel %vm96, %v577, 0
    %v706 = vsel %vm96, %v579, 0
    %v708 = vsel %vm96, %v581, 0
    %v710 = vsel %vm96, %v583, 0
    %v712 = vsel %vm96, %v585, 0
    %v714 = vsel %vm96, %v587, 0
    %v716 = vsel %vm96, %v589, 0
    %v718 = vsel %vm96, %v591, 0
    %v720 = vsel %vm96, %v593, 0
    %v722 = vsel %vm96, %v595, 0
    %v724 = vsel %vm96, %v597, 0
    %v726 = vsel %vm96, %v599, 0
    %v728 = vsel %vm96, %v601, 0
    %v730 = vsel %vm96, %v603, 0
    %v732 = vsel %vm96, %v605, 0
    %734 = vmatprep.subr.mxu0 0.0
    %735 = vmatpush1.xpose.msra.mxu0 %v670
    %736 = vmatprep.subr.mxu0 0.0
    %737 = vmatpush1.xpose.msra.mxu0 %v672
    %738 = vmatprep.subr.mxu0 0.0
    %739 = vmatpush1.xpose.msra.mxu0 %v674
    %740 = vmatprep.subr.mxu0 0.0
    %741 = vmatpush1.xpose.msra.mxu0 %v676
    %742 = vmatprep.subr.mxu0 0.0
    %743 = vmatpush1.xpose.msra.mxu0 %v678
    %744 = vmatprep.subr.mxu0 0.0
    %745 = vmatpush1.xpose.msra.mxu0 %v680
    %746 = vmatprep.subr.mxu0 0.0
    %747 = vmatpush1.xpose.msra.mxu0 %v682
    %748 = vmatprep.subr.mxu0 0.0
    %749 = vmatpush1.xpose.msra.mxu0 %v684
    %750 = vmatprep.subr.mxu0 0.0
    %751 = vmatpush1.xpose.msra.mxu0 %v686
    %752 = vmatprep.subr.mxu0 0.0
    %753 = vmatpush1.xpose.msra.mxu0 %v688
    %754 = vmatprep.subr.mxu0 0.0
    %755 = vmatpush1.xpose.msra.mxu0 %v690
    %756 = vmatprep.subr.mxu0 0.0
    %757 = vmatpush1.xpose.msra.mxu0 %v692
    %758 = vmatprep.subr.mxu0 0.0
    %759 = vmatpush1.xpose.msra.mxu0 %v694
    %760 = vmatprep.subr.mxu0 0.0
    %761 = vmatpush1.xpose.msra.mxu0 %v696
    %762 = vmatprep.subr.mxu0 0.0
    %763 = vmatpush1.xpose.msra.mxu0 %v698
    %764 = vmatprep.subr.mxu0 0.0
    %765 = vmatpush1.xpose.msra.mxu0 %v700
    %766 = vmatprep.subr.mxu0 0.0
    %767 = vmatpush1.xpose.msra.mxu0 %v702
    %768 = vmatprep.subr.mxu0 0.0
    %769 = vmatpush1.xpose.msra.mxu0 %v704
    %770 = vmatprep.subr.mxu0 0.0
    %771 = vmatpush1.xpose.msra.mxu0 %v706
    %772 = vmatprep.subr.mxu0 0.0
    %773 = vmatpush1.xpose.msra.mxu0 %v708
    %774 = vmatprep.subr.mxu0 0.0
    %775 = vmatpush1.xpose.msra.mxu0 %v710
    %776 = vmatprep.subr.mxu0 0.0
    %777 = vmatpush1.xpose.msra.mxu0 %v712
    %778 = vmatprep.subr.mxu0 0.0
    %779 = vmatpush1.xpose.msra.mxu0 %v714
    %780 = vmatprep.subr.mxu0 0.0
    %781 = vmatpush1.xpose.msra.mxu0 %v716
    %782 = vmatprep.subr.mxu0 0.0
    %783 = vmatpush1.xpose.msra.mxu0 %v718
    %784 = vmatprep.subr.mxu0 0.0
    %785 = vmatpush1.xpose.msra.mxu0 %v720
    %786 = vmatprep.subr.mxu0 0.0
    %787 = vmatpush1.xpose.msra.mxu0 %v722
    %788 = vmatprep.subr.mxu0 0.0
    %789 = vmatpush1.xpose.msra.mxu0 %v724
    %790 = vmatprep.subr.mxu0 0.0
    %791 = vmatpush1.xpose.msra.mxu0 %v726
    %792 = vmatprep.subr.mxu0 0.0
    %793 = vmatpush1.xpose.msra.mxu0 %v728
    %794 = vmatprep.subr.mxu0 0.0
    %795 = vmatpush1.xpose.msra.mxu0 %v730
    %796 = vmatprep.subr.mxu0 0.0
    %797 = vmatpush1.xpose.msra.mxu0 %v732
    %798 = vmatprep.mubr.f32.mxu0 0.0
    %799 = vmatmul.mubr.f32.gmra.mrb[0].mxu0 %v606
    %v800 = vpop.f32.mrb[0].mxu0
    %v801 = vadd.f32 %v478, %v800
    %v802 = vpop.f32.mrb[0].mxu0
    %v803 = vadd.f32 %v479, %v802
    %804 = vmatprep.mubr.f32.mxu0 0.0
    %805 = vmatmul.mubr.f32.gmra.mrb[0].mxu0 %v608
    %v806 = vpop.f32.mrb[0].mxu0
    %v807 = vadd.f32 %v480, %v806
    %v808 = vpop.f32.mrb[0].mxu0
    %v809 = vadd.f32 %v481, %v808
    %810 = vmatprep.mubr.f32.mxu0 0.0
    %811 = vmatmul.mubr.f32.gmra.mrb[0].mxu0 %v610
    %v812 = vpop.f32.mrb[0].mxu0
    %v813 = vadd.f32 %v482, %v812
    %v814 = vpop.f32.mrb[0].mxu0
    %v815 = vadd.f32 %v483, %v814
    %816 = vmatprep.mubr.f32.mxu0 0.0
    %817 = vmatmul.mubr.f32.gmra.mrb[0].mxu0 %v612
    %v818 = vpop.f32.mrb[0].mxu0
    %v819 = vadd.f32 %v484, %v818
    %v820 = vpop.f32.mrb[0].mxu0
    %v821 = vadd.f32 %v485, %v820
    %822 = vmatprep.mubr.f32.mxu0 0.0
    %823 = vmatmul.mubr.f32.gmra.mrb[0].mxu0 %v614
    %v824 = vpop.f32.mrb[0].mxu0
    %v825 = vadd.f32 %v486, %v824
    %v826 = vpop.f32.mrb[0].mxu0
    %v827 = vadd.f32 %v487, %v826
    %828 = vmatprep.mubr.f32.mxu0 0.0
    %829 = vmatmul.mubr.f32.gmra.mrb[0].mxu0 %v616
    %v830 = vpop.f32.mrb[0].mxu0
    %v831 = vadd.f32 %v488, %v830
    %v832 = vpop.f32.mrb[0].mxu0
    %v833 = vadd.f32 %v489, %v832
    %834 = vmatprep.mubr.f32.mxu0 0.0
    %835 = vmatmul.mubr.f32.gmra.mrb[0].mxu0 %v618
    %v836 = vpop.f32.mrb[0].mxu0
    %v837 = vadd.f32 %v490, %v836
    %v838 = vpop.f32.mrb[0].mxu0
    %v839 = vadd.f32 %v491, %v838
    %840 = vmatprep.mubr.f32.mxu0 0.0
    %841 = vmatmul.mubr.f32.gmra.mrb[0].mxu0 %v620
    %v842 = vpop.f32.mrb[0].mxu0
    %v843 = vadd.f32 %v492, %v842
    %v844 = vpop.f32.mrb[0].mxu0
    %v845 = vadd.f32 %v493, %v844
    %846 = vmatprep.mubr.f32.mxu0 0.0
    %847 = vmatmul.mubr.f32.gmra.mrb[0].mxu0 %v622
    %v848 = vpop.f32.mrb[0].mxu0
    %v849 = vadd.f32 %v494, %v848
    %v850 = vpop.f32.mrb[0].mxu0
    %v851 = vadd.f32 %v495, %v850
    %852 = vmatprep.mubr.f32.mxu0 0.0
    %853 = vmatmul.mubr.f32.gmra.mrb[0].mxu0 %v624
    %v854 = vpop.f32.mrb[0].mxu0
    %v855 = vadd.f32 %v496, %v854
    %v856 = vpop.f32.mrb[0].mxu0
    %v857 = vadd.f32 %v497, %v856
    %858 = vmatprep.mubr.f32.mxu0 0.0
    %859 = vmatmul.mubr.f32.gmra.mrb[0].mxu0 %v626
    %v860 = vpop.f32.mrb[0].mxu0
    %v861 = vadd.f32 %v498, %v860
    %v862 = vpop.f32.mrb[0].mxu0
    %v863 = vadd.f32 %v499, %v862
    %864 = vmatprep.mubr.f32.mxu0 0.0
    %865 = vmatmul.mubr.f32.gmra.mrb[0].mxu0 %v628
    %v866 = vpop.f32.mrb[0].mxu0
    %v867 = vadd.f32 %v500, %v866
    %v868 = vpop.f32.mrb[0].mxu0
    %v869 = vadd.f32 %v501, %v868
    %870 = vmatprep.mubr.f32.mxu0 0.0
    %871 = vmatmul.mubr.f32.gmra.mrb[0].mxu0 %v630
    %v872 = vpop.f32.mrb[0].mxu0
    %v873 = vadd.f32 %v502, %v872
    %v874 = vpop.f32.mrb[0].mxu0
    %v875 = vadd.f32 %v503, %v874
    %876 = vmatprep.mubr.f32.mxu0 0.0
    %877 = vmatmul.mubr.f32.gmra.mrb[0].mxu0 %v632
    %v878 = vpop.f32.mrb[0].mxu0
    %v879 = vadd.f32 %v504, %v878
    %v880 = vpop.f32.mrb[0].mxu0
    %v881 = vadd.f32 %v505, %v880
    %882 = vmatprep.mubr.f32.mxu0 0.0
    %883 = vmatmul.mubr.f32.gmra.mrb[0].mxu0 %v634
    %v884 = vpop.f32.mrb[0].mxu0
    %v885 = vadd.f32 %v506, %v884
    %v886 = vpop.f32.mrb[0].mxu0
    %v887 = vadd.f32 %v507, %v886
    %888 = vmatprep.mubr.f32.mxu0 0.0
    %889 = vmatmul.mubr.f32.gmra.mrb[0].mxu0 %v636
    %v890 = vpop.f32.mrb[0].mxu0
    %v891 = vadd.f32 %v508, %v890
    %v892 = vpop.f32.mrb[0].mxu0
    %v893 = vadd.f32 %v509, %v892
    %894 = vmatprep.mubr.f32.mxu0 0.0
    %895 = vmatmul.mubr.f32.gmra.mrb[0].mxu0 %v638
    %v896 = vpop.f32.mrb[0].mxu0
    %v897 = vadd.f32 %v510, %v896
    %v898 = vpop.f32.mrb[0].mxu0
    %v899 = vadd.f32 %v511, %v898
    %900 = vmatprep.mubr.f32.mxu0 0.0
    %901 = vmatmul.mubr.f32.gmra.mrb[0].mxu0 %v640
    %v902 = vpop.f32.mrb[0].mxu0
    %v903 = vadd.f32 %v512, %v902
    %v904 = vpop.f32.mrb[0].mxu0
    %v905 = vadd.f32 %v513, %v904
    %906 = vmatprep.mubr.f32.mxu0 0.0
    %907 = vmatmul.mubr.f32.gmra.mrb[0].mxu0 %v642
    %v908 = vpop.f32.mrb[0].mxu0
    %v909 = vadd.f32 %v514, %v908
    %v910 = vpop.f32.mrb[0].mxu0
    %v911 = vadd.f32 %v515, %v910
    %912 = vmatprep.mubr.f32.mxu0 0.0
    %913 = vmatmul.mubr.f32.gmra.mrb[0].mxu0 %v644
    %v914 = vpop.f32.mrb[0].mxu0
    %v915 = vadd.f32 %v516, %v914
    %v916 = vpop.f32.mrb[0].mxu0
    %v917 = vadd.f32 %v517, %v916
    %918 = vmatprep.mubr.f32.mxu0 0.0
    %919 = vmatmul.mubr.f32.gmra.mrb[0].mxu0 %v646
    %v920 = vpop.f32.mrb[0].mxu0
    %v921 = vadd.f32 %v518, %v920
    %v922 = vpop.f32.mrb[0].mxu0
    %v923 = vadd.f32 %v519, %v922
    %924 = vmatprep.mubr.f32.mxu0 0.0
    %925 = vmatmul.mubr.f32.gmra.mrb[0].mxu0 %v648
    %v926 = vpop.f32.mrb[0].mxu0
    %v927 = vadd.f32 %v520, %v926
    %v928 = vpop.f32.mrb[0].mxu0
    %v929 = vadd.f32 %v521, %v928
    %930 = vmatprep.mubr.f32.mxu0 0.0
    %931 = vmatmul.mubr.f32.gmra.mrb[0].mxu0 %v650
    %v932 = vpop.f32.mrb[0].mxu0
    %v933 = vadd.f32 %v522, %v932
    %v934 = vpop.f32.mrb[0].mxu0
    %v935 = vadd.f32 %v523, %v934
    %936 = vmatprep.mubr.f32.mxu0 0.0
    %937 = vmatmul.mubr.f32.gmra.mrb[0].mxu0 %v652
    %v938 = vpop.f32.mrb[0].mxu0
    %v939 = vadd.f32 %v524, %v938
    %v940 = vpop.f32.mrb[0].mxu0
    %v941 = vadd.f32 %v525, %v940
    %942 = vmatprep.mubr.f32.mxu0 0.0
    %943 = vmatmul.mubr.f32.gmra.mrb[0].mxu0 %v654
    %v944 = vpop.f32.mrb[0].mxu0
    %v945 = vadd.f32 %v526, %v944
    %v946 = vpop.f32.mrb[0].mxu0
    %v947 = vadd.f32 %v527, %v946
    %948 = vmatprep.mubr.f32.mxu0 0.0
    %949 = vmatmul.mubr.f32.gmra.mrb[0].mxu0 %v656
    %v950 = vpop.f32.mrb[0].mxu0
    %v951 = vadd.f32 %v528, %v950
    %v952 = vpop.f32.mrb[0].mxu0
    %v953 = vadd.f32 %v529, %v952
    %954 = vmatprep.mubr.f32.mxu0 0.0
    %955 = vmatmul.mubr.f32.gmra.mrb[0].mxu0 %v658
    %v956 = vpop.f32.mrb[0].mxu0
    %v957 = vadd.f32 %v530, %v956
    %v958 = vpop.f32.mrb[0].mxu0
    %v959 = vadd.f32 %v531, %v958
    %960 = vmatprep.mubr.f32.mxu0 0.0
    %961 = vmatmul.mubr.f32.gmra.mrb[0].mxu0 %v660
    %v962 = vpop.f32.mrb[0].mxu0
    %v963 = vadd.f32 %v532, %v962
    %v964 = vpop.f32.mrb[0].mxu0
    %v965 = vadd.f32 %v533, %v964
    %966 = vmatprep.mubr.f32.mxu0 0.0
    %967 = vmatmul.mubr.f32.gmra.mrb[0].mxu0 %v662
    %v968 = vpop.f32.mrb[0].mxu0
    %v969 = vadd.f32 %v534, %v968
    %v970 = vpop.f32.mrb[0].mxu0
    %v971 = vadd.f32 %v535, %v970
    %972 = vmatprep.mubr.f32.mxu0 0.0
    %973 = vmatmul.mubr.f32.gmra.mrb[0].mxu0 %v664
    %v974 = vpop.f32.mrb[0].mxu0
    %v975 = vadd.f32 %v536, %v974
    %v976 = vpop.f32.mrb[0].mxu0
    %v977 = vadd.f32 %v537, %v976
    %978 = vmatprep.mubr.f32.mxu0 0.0
    %979 = vmatmul.mubr.f32.gmra.mrb[0].mxu0 %v666
    %v980 = vpop.f32.mrb[0].mxu0
    %v981 = vadd.f32 %v538, %v980
    %v982 = vpop.f32.mrb[0].mxu0
    %v983 = vadd.f32 %v539, %v982
    %984 = vmatprep.mubr.f32.mxu0 0.0
    %985 = vmatmul.mubr.f32.gmra.mrb[0].mxu0 %v668
    %v986 = vpop.f32.mrb[0].mxu0
    %v987 = vadd.f32 %v540, %v986
    %v988 = vpop.f32.mrb[0].mxu0
    %v989 = vadd.f32 %v541, %v988
    %990 = vdwg.mxu0
    %v991 = vmax.f32 %v801, %v803
    %992 = vmax.xlane.f32.xlu0 %v991
    %v993 = vpop.xlane.xlu0 %992
    %v994 = vmax.f32 %v807, %v809
    %995 = vmax.xlane.f32.xlu0 %v994
    %v996 = vpop.xlane.xlu0 %995
    %v997 = vmax.f32 %v813, %v815
    %998 = vmax.xlane.f32.xlu0 %v997
    %v999 = vpop.xlane.xlu0 %998
    %v1000 = vmax.f32 %v819, %v821
    %1001 = vmax.xlane.f32.xlu0 %v1000
    %v1002 = vpop.xlane.xlu0 %1001
    %v1003 = vmax.f32 %v825, %v827
    %1004 = vmax.xlane.f32.xlu0 %v1003
    %v1005 = vpop.xlane.xlu0 %1004
    %v1006 = vmax.f32 %v831, %v833
    %1007 = vmax.xlane.f32.xlu0 %v1006
    %v1008 = vpop.xlane.xlu0 %1007
    %v1009 = vmax.f32 %v837, %v839
    %1010 = vmax.xlane.f32.xlu0 %v1009
    %v1011 = vpop.xlane.xlu0 %1010
    %v1012 = vmax.f32 %v843, %v845
    %1013 = vmax.xlane.f32.xlu0 %v1012
    %v1014 = vpop.xlane.xlu0 %1013
    %v1015 = vmax.f32 %v849, %v851
    %1016 = vmax.xlane.f32.xlu0 %v1015
    %v1017 = vpop.xlane.xlu0 %1016
    %v1018 = vmax.f32 %v855, %v857
    %1019 = vmax.xlane.f32.xlu0 %v1018
    %v1020 = vpop.xlane.xlu0 %1019
    %v1021 = vmax.f32 %v861, %v863
    %1022 = vmax.xlane.f32.xlu0 %v1021
    %v1023 = vpop.xlane.xlu0 %1022
    %v1024 = vmax.f32 %v867, %v869
    %1025 = vmax.xlane.f32.xlu0 %v1024
    %v1026 = vpop.xlane.xlu0 %1025
    %v1027 = vmax.f32 %v873, %v875
    %1028 = vmax.xlane.f32.xlu0 %v1027
    %v1029 = vpop.xlane.xlu0 %1028
    %v1030 = vmax.f32 %v879, %v881
    %1031 = vmax.xlane.f32.xlu0 %v1030
    %v1032 = vpop.xlane.xlu0 %1031
    %v1033 = vmax.f32 %v885, %v887
    %1034 = vmax.xlane.f32.xlu0 %v1033
    %v1035 = vpop.xlane.xlu0 %1034
    %v1036 = vmax.f32 %v891, %v893
    %1037 = vmax.xlane.f32.xlu0 %v1036
    %v1038 = vpop.xlane.xlu0 %1037
    %v1039 = vmax.f32 %v897, %v899
    %1040 = vmax.xlane.f32.xlu0 %v1039
    %v1041 = vpop.xlane.xlu0 %1040
    %v1042 = vmax.f32 %v903, %v905
    %1043 = vmax.xlane.f32.xlu0 %v1042
    %v1044 = vpop.xlane.xlu0 %1043
    %v1045 = vmax.f32 %v909, %v911
    %1046 = vmax.xlane.f32.xlu0 %v1045
    %v1047 = vpop.xlane.xlu0 %1046
    %v1048 = vmax.f32 %v915, %v917
    %1049 = vmax.xlane.f32.xlu0 %v1048
    %v1050 = vpop.xlane.xlu0 %1049
    %v1051 = vmax.f32 %v921, %v923
    %1052 = vmax.xlane.f32.xlu0 %v1051
    %v1053 = vpop.xlane.xlu0 %1052
    %v1054 = vmax.f32 %v927, %v929
    %1055 = vmax.xlane.f32.xlu0 %v1054
    %v1056 = vpop.xlane.xlu0 %1055
    %v1057 = vmax.f32 %v933, %v935
    %1058 = vmax.xlane.f32.xlu0 %v1057
    %v1059 = vpop.xlane.xlu0 %1058
    %v1060 = vmax.f32 %v939, %v941
    %1061 = vmax.xlane.f32.xlu0 %v1060
    %v1062 = vpop.xlane.xlu0 %1061
    %v1063 = vmax.f32 %v945, %v947
    %1064 = vmax.xlane.f32.xlu0 %v1063
    %v1065 = vpop.xlane.xlu0 %1064
    %v1066 = vmax.f32 %v951, %v953
    %1067 = vmax.xlane.f32.xlu0 %v1066
    %v1068 = vpop.xlane.xlu0 %1067
    %v1069 = vmax.f32 %v957, %v959
    %1070 = vmax.xlane.f32.xlu0 %v1069
    %v1071 = vpop.xlane.xlu0 %1070
    %v1072 = vmax.f32 %v963, %v965
    %1073 = vmax.xlane.f32.xlu0 %v1072
    %v1074 = vpop.xlane.xlu0 %1073
    %v1075 = vmax.f32 %v969, %v971
    %1076 = vmax.xlane.f32.xlu0 %v1075
    %v1077 = vpop.xlane.xlu0 %1076
    %v1078 = vmax.f32 %v975, %v977
    %1079 = vmax.xlane.f32.xlu0 %v1078
    %v1080 = vpop.xlane.xlu0 %1079
    %v1081 = vmax.f32 %v981, %v983
    %1082 = vmax.xlane.f32.xlu0 %v1081
    %v1083 = vpop.xlane.xlu0 %1082
    %v1084 = vmax.f32 %v987, %v989
    %1085 = vmax.xlane.f32.xlu0 %v1084
    %v1086 = vpop.xlane.xlu0 %1085
    %v1087 = vsub.f32 %v801, %v993
    %v1088 = vsub.f32 %v803, %v993
    %v1089 = vsub.f32 %v807, %v996
    %v1090 = vsub.f32 %v809, %v996
    %v1091 = vsub.f32 %v813, %v999
    %v1092 = vsub.f32 %v815, %v999
    %v1093 = vsub.f32 %v819, %v1002
    %v1094 = vsub.f32 %v821, %v1002
    %v1095 = vsub.f32 %v825, %v1005
    %v1096 = vsub.f32 %v827, %v1005
    %v1097 = vsub.f32 %v831, %v1008
    %v1098 = vsub.f32 %v833, %v1008
    %v1099 = vsub.f32 %v837, %v1011
    %v1100 = vsub.f32 %v839, %v1011
    %v1101 = vsub.f32 %v843, %v1014
    %v1102 = vsub.f32 %v845, %v1014
    %v1103 = vsub.f32 %v849, %v1017
    %v1104 = vsub.f32 %v851, %v1017
    %v1105 = vsub.f32 %v855, %v1020
    %v1106 = vsub.f32 %v857, %v1020
    %v1107 = vsub.f32 %v861, %v1023
    %v1108 = vsub.f32 %v863, %v1023
    %v1109 = vsub.f32 %v867, %v1026
    %v1110 = vsub.f32 %v869, %v1026
    %v1111 = vsub.f32 %v873, %v1029
    %v1112 = vsub.f32 %v875, %v1029
    %v1113 = vsub.f32 %v879, %v1032
    %v1114 = vsub.f32 %v881, %v1032
    %v1115 = vsub.f32 %v885, %v1035
    %v1116 = vsub.f32 %v887, %v1035
    %v1117 = vsub.f32 %v891, %v1038
    %v1118 = vsub.f32 %v893, %v1038
    %v1119 = vsub.f32 %v897, %v1041
    %v1120 = vsub.f32 %v899, %v1041
    %v1121 = vsub.f32 %v903, %v1044
    %v1122 = vsub.f32 %v905, %v1044
    %v1123 = vsub.f32 %v909, %v1047
    %v1124 = vsub.f32 %v911, %v1047
    %v1125 = vsub.f32 %v915, %v1050
    %v1126 = vsub.f32 %v917, %v1050
    %v1127 = vsub.f32 %v921, %v1053
    %v1128 = vsub.f32 %v923, %v1053
    %v1129 = vsub.f32 %v927, %v1056
    %v1130 = vsub.f32 %v929, %v1056
    %v1131 = vsub.f32 %v933, %v1059
    %v1132 = vsub.f32 %v935, %v1059
    %v1133 = vsub.f32 %v939, %v1062
    %v1134 = vsub.f32 %v941, %v1062
    %v1135 = vsub.f32 %v945, %v1065
    %v1136 = vsub.f32 %v947, %v1065
    %v1137 = vsub.f32 %v951, %v1068
    %v1138 = vsub.f32 %v953, %v1068
    %v1139 = vsub.f32 %v957, %v1071
    %v1140 = vsub.f32 %v959, %v1071
    %v1141 = vsub.f32 %v963, %v1074
    %v1142 = vsub.f32 %v965, %v1074
    %v1143 = vsub.f32 %v969, %v1077
    %v1144 = vsub.f32 %v971, %v1077
    %v1145 = vsub.f32 %v975, %v1080
    %v1146 = vsub.f32 %v977, %v1080
    %v1147 = vsub.f32 %v981, %v1083
    %v1148 = vsub.f32 %v983, %v1083
    %v1149 = vsub.f32 %v987, %v1086
    %v1150 = vsub.f32 %v989, %v1086
    %v1151 = vmul.f32 %v1087, 1.442695
    %v1152 = vpow.pop %v1151
    %v1153 = vmul.f32 %v1088, 1.442695
    %v1154 = vpow.pop %v1153
    %v1155 = vmul.f32 %v1089, 1.442695
    %v1156 = vpow.pop %v1155
    %v1157 = vmul.f32 %v1090, 1.442695
    %v1158 = vpow.pop %v1157
    %v1159 = vmul.f32 %v1091, 1.442695
    %v1160 = vpow.pop %v1159
    %v1161 = vmul.f32 %v1092, 1.442695
    %v1162 = vpow.pop %v1161
    %v1163 = vmul.f32 %v1093, 1.442695
    %v1164 = vpow.pop %v1163
    %v1165 = vmul.f32 %v1094, 1.442695
    %v1166 = vpow.pop %v1165
    %v1167 = vmul.f32 %v1095, 1.442695
    %v1168 = vpow.pop %v1167
    %v1169 = vmul.f32 %v1096, 1.442695
    %v1170 = vpow.pop %v1169
    %v1171 = vmul.f32 %v1097, 1.442695
    %v1172 = vpow.pop %v1171
    %v1173 = vmul.f32 %v1098, 1.442695
    %v1174 = vpow.pop %v1173
    %v1175 = vmul.f32 %v1099, 1.442695
    %v1176 = vpow.pop %v1175
    %v1177 = vmul.f32 %v1100, 1.442695
    %v1178 = vpow.pop %v1177
    %v1179 = vmul.f32 %v1101, 1.442695
    %v1180 = vpow.pop %v1179
    %v1181 = vmul.f32 %v1102, 1.442695
    %v1182 = vpow.pop %v1181
    %v1183 = vmul.f32 %v1103, 1.442695
    %v1184 = vpow.pop %v1183
    %v1185 = vmul.f32 %v1104, 1.442695
    %v1186 = vpow.pop %v1185
    %v1187 = vmul.f32 %v1105, 1.442695
    %v1188 = vpow.pop %v1187
    %v1189 = vmul.f32 %v1106, 1.442695
    %v1190 = vpow.pop %v1189
    %v1191 = vmul.f32 %v1107, 1.442695
    %v1192 = vpow.pop %v1191
    %v1193 = vmul.f32 %v1108, 1.442695
    %v1194 = vpow.pop %v1193
    %v1195 = vmul.f32 %v1109, 1.442695
    %v1196 = vpow.pop %v1195
    %v1197 = vmul.f32 %v1110, 1.442695
    %v1198 = vpow.pop %v1197
    %v1199 = vmul.f32 %v1111, 1.442695
    %v1200 = vpow.pop %v1199
    %v1201 = vmul.f32 %v1112, 1.442695
    %v1202 = vpow.pop %v1201
    %v1203 = vmul.f32 %v1113, 1.442695
    %v1204 = vpow.pop %v1203
    %v1205 = vmul.f32 %v1114, 1.442695
    %v1206 = vpow.pop %v1205
    %v1207 = vmul.f32 %v1115, 1.442695
    %v1208 = vpow.pop %v1207
    %v1209 = vmul.f32 %v1116, 1.442695
    %v1210 = vpow.pop %v1209
    %v1211 = vmul.f32 %v1117, 1.442695
    %v1212 = vpow.pop %v1211
    %v1213 = vmul.f32 %v1118, 1.442695
    %v1214 = vpow.pop %v1213
    %v1215 = vmul.f32 %v1119, 1.442695
    %v1216 = vpow.pop %v1215
    %v1217 = vmul.f32 %v1120, 1.442695
    %v1218 = vpow.pop %v1217
    %v1219 = vmul.f32 %v1121, 1.442695
    %v1220 = vpow.pop %v1219
    %v1221 = vmul.f32 %v1122, 1.442695
    %v1222 = vpow.pop %v1221
    %v1223 = vmul.f32 %v1123, 1.442695
    %v1224 = vpow.pop %v1223
    %v1225 = vmul.f32 %v1124, 1.442695
    %v1226 = vpow.pop %v1225
    %v1227 = vmul.f32 %v1125, 1.442695
    %v1228 = vpow.pop %v1227
    %v1229 = vmul.f32 %v1126, 1.442695
    %v1230 = vpow.pop %v1229
    %v1231 = vmul.f32 %v1127, 1.442695
    %v1232 = vpow.pop %v1231
    %v1233 = vmul.f32 %v1128, 1.442695
    %v1234 = vpow.pop %v1233
    %v1235 = vmul.f32 %v1129, 1.442695
    %v1236 = vpow.pop %v1235
    %v1237 = vmul.f32 %v1130, 1.442695
    %v1238 = vpow.pop %v1237
    %v1239 = vmul.f32 %v1131, 1.442695
    %v1240 = vpow.pop %v1239
    %v1241 = vmul.f32 %v1132, 1.442695
    %v1242 = vpow.pop %v1241
    %v1243 = vmul.f32 %v1133, 1.442695
    %v1244 = vpow.pop %v1243
    %v1245 = vmul.f32 %v1134, 1.442695
    %v1246 = vpow.pop %v1245
    %v1247 = vmul.f32 %v1135, 1.442695
    %v1248 = vpow.pop %v1247
    %v1249 = vmul.f32 %v1136, 1.442695
    %v1250 = vpow.pop %v1249
    %v1251 = vmul.f32 %v1137, 1.442695
    %v1252 = vpow.pop %v1251
    %v1253 = vmul.f32 %v1138, 1.442695
    %v1254 = vpow.pop %v1253
    %v1255 = vmul.f32 %v1139, 1.442695
    %v1256 = vpow.pop %v1255
    %v1257 = vmul.f32 %v1140, 1.442695
    %v1258 = vpow.pop %v1257
    %v1259 = vmul.f32 %v1141, 1.442695
    %v1260 = vpow.pop %v1259
    %v1261 = vmul.f32 %v1142, 1.442695
    %v1262 = vpow.pop %v1261
    %v1263 = vmul.f32 %v1143, 1.442695
    %v1264 = vpow.pop %v1263
    %v1265 = vmul.f32 %v1144, 1.442695
    %v1266 = vpow.pop %v1265
    %v1267 = vmul.f32 %v1145, 1.442695
    %v1268 = vpow.pop %v1267
    %v1269 = vmul.f32 %v1146, 1.442695
    %v1270 = vpow.pop %v1269
    %v1271 = vmul.f32 %v1147, 1.442695
    %v1272 = vpow.pop %v1271
    %v1273 = vmul.f32 %v1148, 1.442695
    %v1274 = vpow.pop %v1273
    %v1275 = vmul.f32 %v1149, 1.442695
    %v1276 = vpow.pop %v1275
    %v1277 = vmul.f32 %v1150, 1.442695
    %v1278 = vpow.pop %v1277
    %v1279 = vadd.f32 %v1152, %v1154
    %1280 = vadd.xlane.f32.xlu0 %v1279
    %v1281 = vpop.xlane.xlu0 %1280
    %v1282 = vadd.f32 %v1156, %v1158
    %1283 = vadd.xlane.f32.xlu0 %v1282
    %v1284 = vpop.xlane.xlu0 %1283
    %v1285 = vadd.f32 %v1160, %v1162
    %1286 = vadd.xlane.f32.xlu0 %v1285
    %v1287 = vpop.xlane.xlu0 %1286
    %v1288 = vadd.f32 %v1164, %v1166
    %1289 = vadd.xlane.f32.xlu0 %v1288
    %v1290 = vpop.xlane.xlu0 %1289
    %v1291 = vadd.f32 %v1168, %v1170
    %1292 = vadd.xlane.f32.xlu0 %v1291
    %v1293 = vpop.xlane.xlu0 %1292
    %v1294 = vadd.f32 %v1172, %v1174
    %1295 = vadd.xlane.f32.xlu0 %v1294
    %v1296 = vpop.xlane.xlu0 %1295
    %v1297 = vadd.f32 %v1176, %v1178
    %1298 = vadd.xlane.f32.xlu0 %v1297
    %v1299 = vpop.xlane.xlu0 %1298
    %v1300 = vadd.f32 %v1180, %v1182
    %1301 = vadd.xlane.f32.xlu0 %v1300
    %v1302 = vpop.xlane.xlu0 %1301
    %v1303 = vadd.f32 %v1184, %v1186
    %1304 = vadd.xlane.f32.xlu0 %v1303
    %v1305 = vpop.xlane.xlu0 %1304
    %v1306 = vadd.f32 %v1188, %v1190
    %1307 = vadd.xlane.f32.xlu0 %v1306
    %v1308 = vpop.xlane.xlu0 %1307
    %v1309 = vadd.f32 %v1192, %v1194
    %1310 = vadd.xlane.f32.xlu0 %v1309
    %v1311 = vpop.xlane.xlu0 %1310
    %v1312 = vadd.f32 %v1196, %v1198
    %1313 = vadd.xlane.f32.xlu0 %v1312
    %v1314 = vpop.xlane.xlu0 %1313
    %v1315 = vadd.f32 %v1200, %v1202
    %1316 = vadd.xlane.f32.xlu0 %v1315
    %v1317 = vpop.xlane.xlu0 %1316
    %v1318 = vadd.f32 %v1204, %v1206
    %1319 = vadd.xlane.f32.xlu0 %v1318
    %v1320 = vpop.xlane.xlu0 %1319
    %v1321 = vadd.f32 %v1208, %v1210
    %1322 = vadd.xlane.f32.xlu0 %v1321
    %v1323 = vpop.xlane.xlu0 %1322
    %v1324 = vadd.f32 %v1212, %v1214
    %1325 = vadd.xlane.f32.xlu0 %v1324
    %v1326 = vpop.xlane.xlu0 %1325
    %v1327 = vadd.f32 %v1216, %v1218
    %1328 = vadd.xlane.f32.xlu0 %v1327
    %v1329 = vpop.xlane.xlu0 %1328
    %v1330 = vadd.f32 %v1220, %v1222
    %1331 = vadd.xlane.f32.xlu0 %v1330
    %v1332 = vpop.xlane.xlu0 %1331
    %v1333 = vadd.f32 %v1224, %v1226
    %1334 = vadd.xlane.f32.xlu0 %v1333
    %v1335 = vpop.xlane.xlu0 %1334
    %v1336 = vadd.f32 %v1228, %v1230
    %1337 = vadd.xlane.f32.xlu0 %v1336
    %v1338 = vpop.xlane.xlu0 %1337
    %v1339 = vadd.f32 %v1232, %v1234
    %1340 = vadd.xlane.f32.xlu0 %v1339
    %v1341 = vpop.xlane.xlu0 %1340
    %v1342 = vadd.f32 %v1236, %v1238
    %1343 = vadd.xlane.f32.xlu0 %v1342
    %v1344 = vpop.xlane.xlu0 %1343
    %v1345 = vadd.f32 %v1240, %v1242
    %1346 = vadd.xlane.f32.xlu0 %v1345
    %v1347 = vpop.xlane.xlu0 %1346
    %v1348 = vadd.f32 %v1244, %v1246
    %1349 = vadd.xlane.f32.xlu0 %v1348
    %v1350 = vpop.xlane.xlu0 %1349
    %v1351 = vadd.f32 %v1248, %v1250
    %1352 = vadd.xlane.f32.xlu0 %v1351
    %v1353 = vpop.xlane.xlu0 %1352
    %v1354 = vadd.f32 %v1252, %v1254
    %1355 = vadd.xlane.f32.xlu0 %v1354
    %v1356 = vpop.xlane.xlu0 %1355
    %v1357 = vadd.f32 %v1256, %v1258
    %1358 = vadd.xlane.f32.xlu0 %v1357
    %v1359 = vpop.xlane.xlu0 %1358
    %v1360 = vadd.f32 %v1260, %v1262
    %1361 = vadd.xlane.f32.xlu0 %v1360
    %v1362 = vpop.xlane.xlu0 %1361
    %v1363 = vadd.f32 %v1264, %v1266
    %1364 = vadd.xlane.f32.xlu0 %v1363
    %v1365 = vpop.xlane.xlu0 %1364
    %v1366 = vadd.f32 %v1268, %v1270
    %1367 = vadd.xlane.f32.xlu0 %v1366
    %v1368 = vpop.xlane.xlu0 %1367
    %v1369 = vadd.f32 %v1272, %v1274
    %1370 = vadd.xlane.f32.xlu0 %v1369
    %v1371 = vpop.xlane.xlu0 %1370
    %v1372 = vadd.f32 %v1276, %v1278
    %1373 = vadd.xlane.f32.xlu0 %v1372
    %v1374 = vpop.xlane.xlu0 %1373
    %v1375 = vrcp.pop %v1281
    %v1376 = vmul.f32 %v1152, %v1375
    %v1377 = vmul.f32 %v1154, %v1375
    %v1378 = vrcp.pop %v1284
    %v1379 = vmul.f32 %v1156, %v1378
    %v1380 = vmul.f32 %v1158, %v1378
    %v1381 = vrcp.pop %v1287
    %v1382 = vmul.f32 %v1160, %v1381
    %v1383 = vmul.f32 %v1162, %v1381
    %v1384 = vrcp.pop %v1290
    %v1385 = vmul.f32 %v1164, %v1384
    %v1386 = vmul.f32 %v1166, %v1384
    %v1387 = vrcp.pop %v1293
    %v1388 = vmul.f32 %v1168, %v1387
    %v1389 = vmul.f32 %v1170, %v1387
    %v1390 = vrcp.pop %v1296
    %v1391 = vmul.f32 %v1172, %v1390
    %v1392 = vmul.f32 %v1174, %v1390
    %v1393 = vrcp.pop %v1299
    %v1394 = vmul.f32 %v1176, %v1393
    %v1395 = vmul.f32 %v1178, %v1393
    %v1396 = vrcp.pop %v1302
    %v1397 = vmul.f32 %v1180, %v1396
    %v1398 = vmul.f32 %v1182, %v1396
    %v1399 = vrcp.pop %v1305
    %v1400 = vmul.f32 %v1184, %v1399
    %v1401 = vmul.f32 %v1186, %v1399
    %v1402 = vrcp.pop %v1308
    %v1403 = vmul.f32 %v1188, %v1402
    %v1404 = vmul.f32 %v1190, %v1402
    %v1405 = vrcp.pop %v1311
    %v1406 = vmul.f32 %v1192, %v1405
    %v1407 = vmul.f32 %v1194, %v1405
    %v1408 = vrcp.pop %v1314
    %v1409 = vmul.f32 %v1196, %v1408
    %v1410 = vmul.f32 %v1198, %v1408
    %v1411 = vrcp.pop %v1317
    %v1412 = vmul.f32 %v1200, %v1411
    %v1413 = vmul.f32 %v1202, %v1411
    %v1414 = vrcp.pop %v1320
    %v1415 = vmul.f32 %v1204, %v1414
    %v1416 = vmul.f32 %v1206, %v1414
    %v1417 = vrcp.pop %v1323
    %v1418 = vmul.f32 %v1208, %v1417
    %v1419 = vmul.f32 %v1210, %v1417
    %v1420 = vrcp.pop %v1326
    %v1421 = vmul.f32 %v1212, %v1420
    %v1422 = vmul.f32 %v1214, %v1420
    %v1423 = vrcp.pop %v1329
    %v1424 = vmul.f32 %v1216, %v1423
    %v1425 = vmul.f32 %v1218, %v1423
    %v1426 = vrcp.pop %v1332
    %v1427 = vmul.f32 %v1220, %v1426
    %v1428 = vmul.f32 %v1222, %v1426
    %v1429 = vrcp.pop %v1335
    %v1430 = vmul.f32 %v1224, %v1429
    %v1431 = vmul.f32 %v1226, %v1429
    %v1432 = vrcp.pop %v1338
    %v1433 = vmul.f32 %v1228, %v1432
    %v1434 = vmul.f32 %v1230, %v1432
    %v1435 = vrcp.pop %v1341
    %v1436 = vmul.f32 %v1232, %v1435
    %v1437 = vmul.f32 %v1234, %v1435
    %v1438 = vrcp.pop %v1344
    %v1439 = vmul.f32 %v1236, %v1438
    %v1440 = vmul.f32 %v1238, %v1438
    %v1441 = vrcp.pop %v1347
    %v1442 = vmul.f32 %v1240, %v1441
    %v1443 = vmul.f32 %v1242, %v1441
    %v1444 = vrcp.pop %v1350
    %v1445 = vmul.f32 %v1244, %v1444
    %v1446 = vmul.f32 %v1246, %v1444
    %v1447 = vrcp.pop %v1353
    %v1448 = vmul.f32 %v1248, %v1447
    %v1449 = vmul.f32 %v1250, %v1447
    %v1450 = vrcp.pop %v1356
    %v1451 = vmul.f32 %v1252, %v1450
    %v1452 = vmul.f32 %v1254, %v1450
    %v1453 = vrcp.pop %v1359
    %v1454 = vmul.f32 %v1256, %v1453
    %v1455 = vmul.f32 %v1258, %v1453
    %v1456 = vrcp.pop %v1362
    %v1457 = vmul.f32 %v1260, %v1456
    %v1458 = vmul.f32 %v1262, %v1456
    %v1459 = vrcp.pop %v1365
    %v1460 = vmul.f32 %v1264, %v1459
    %v1461 = vmul.f32 %v1266, %v1459
    %v1462 = vrcp.pop %v1368
    %v1463 = vmul.f32 %v1268, %v1462
    %v1464 = vmul.f32 %v1270, %v1462
    %v1465 = vrcp.pop %v1371
    %v1466 = vmul.f32 %v1272, %v1465
    %v1467 = vmul.f32 %v1274, %v1465
    %v1468 = vrcp.pop %v1374
    %v1469 = vmul.f32 %v1276, %v1468
    %v1470 = vmul.f32 %v1278, %v1468
    %1471 = vrot.lane.b32.xlu0 %v384, 64
    %v1472 = vpop.permute.xlu0 %1471
    %1473 = vrot.lane.b32.xlu0 %v389, 64
    %v1474 = vpop.permute.xlu0 %1473
    %1475 = vrot.lane.b32.xlu0 %v394, 64
    %v1476 = vpop.permute.xlu0 %1475
    %1477 = vrot.lane.b32.xlu0 %v399, 64
    %v1478 = vpop.permute.xlu0 %1477
    %1479 = vrot.lane.b32.xlu0 %v427, 64
    %v1480 = vpop.permute.xlu0 %1479
    %1481 = vrot.lane.b32.xlu0 %v429, 64
    %v1482 = vpop.permute.xlu0 %1481
    %1483 = vrot.lane.b32.xlu0 %v431, 64
    %v1484 = vpop.permute.xlu0 %1483
    %1485 = vrot.lane.b32.xlu0 %v433, 64
    %v1486 = vpop.permute.xlu0 %1485
    %1487 = vrot.lane.b32.xlu0 %v435, 64
    %v1488 = vpop.permute.xlu0 %1487
    %1489 = vrot.lane.b32.xlu0 %v437, 64
    %v1490 = vpop.permute.xlu0 %1489
    %1491 = vrot.lane.b32.xlu0 %v439, 64
    %v1492 = vpop.permute.xlu0 %1491
    %1493 = vrot.lane.b32.xlu0 %v441, 64
    %v1494 = vpop.permute.xlu0 %1493
    %1495 = vrot.lane.b32.xlu0 %v443, 64
    %v1496 = vpop.permute.xlu0 %1495
    %1497 = vrot.lane.b32.xlu0 %v445, 64
    %v1498 = vpop.permute.xlu0 %1497
    %1499 = vrot.lane.b32.xlu0 %v447, 64
    %v1500 = vpop.permute.xlu0 %1499
    %1501 = vrot.lane.b32.xlu0 %v449, 64
    %v1502 = vpop.permute.xlu0 %1501
    %1503 = vrot.lane.b32.xlu0 %v404, 64
    %v1504 = vpop.permute.xlu0 %1503
    %1505 = vrot.lane.b32.xlu0 %v409, 64
    %v1506 = vpop.permute.xlu0 %1505
    %1507 = vrot.lane.b32.xlu0 %v414, 64
    %v1508 = vpop.permute.xlu0 %1507
    %1509 = vrot.lane.b32.xlu0 %v419, 64
    %v1510 = vpop.permute.xlu0 %1509
    %1511 = vrot.lane.b32.xlu0 %v455, 64
    %v1512 = vpop.permute.xlu0 %1511
    %1513 = vrot.lane.b32.xlu0 %v457, 64
    %v1514 = vpop.permute.xlu0 %1513
    %1515 = vrot.lane.b32.xlu0 %v459, 64
    %v1516 = vpop.permute.xlu0 %1515
    %1517 = vrot.lane.b32.xlu0 %v461, 64
    %v1518 = vpop.permute.xlu0 %1517
    %1519 = vrot.lane.b32.xlu0 %v463, 64
    %v1520 = vpop.permute.xlu0 %1519
    %1521 = vrot.lane.b32.xlu0 %v465, 64
    %v1522 = vpop.permute.xlu0 %1521
    %1523 = vrot.lane.b32.xlu0 %v467, 64
    %v1524 = vpop.permute.xlu0 %1523
    %1525 = vrot.lane.b32.xlu0 %v469, 64
    %v1526 = vpop.permute.xlu0 %1525
    %1527 = vrot.lane.b32.xlu0 %v471, 64
    %v1528 = vpop.permute.xlu0 %1527
    %1529 = vrot.lane.b32.xlu0 %v473, 64
    %v1530 = vpop.permute.xlu0 %1529
    %1531 = vrot.lane.b32.xlu0 %v475, 64
    %v1532 = vpop.permute.xlu0 %1531
    %1533 = vrot.lane.b32.xlu0 %v477, 64
    %v1534 = vpop.permute.xlu0 %1533
    %1567 = vmatprep.subr.mxu0 0.0
    %1568 = vmatpush1.msra.mxu0 %v1472
    %1569 = vmatprep.subr.mxu0 0.0
    %1570 = vmatpush1.msra.mxu0 %v1474
    %1571 = vmatprep.subr.mxu0 0.0
    %1572 = vmatpush1.msra.mxu0 %v1476
    %1573 = vmatprep.subr.mxu0 0.0
    %1574 = vmatpush1.msra.mxu0 %v1478
    %1575 = vmatprep.subr.mxu0 0.0
    %1576 = vmatpush1.msra.mxu0 %v1480
    %1577 = vmatprep.subr.mxu0 0.0
    %1578 = vmatpush1.msra.mxu0 %v1482
    %1579 = vmatprep.subr.mxu0 0.0
    %1580 = vmatpush1.msra.mxu0 %v1484
    %1581 = vmatprep.subr.mxu0 0.0
    %1582 = vmatpush1.msra.mxu0 %v1486
    %1583 = vmatprep.subr.mxu0 0.0
    %1584 = vmatpush1.msra.mxu0 %v1488
    %1585 = vmatprep.subr.mxu0 0.0
    %1586 = vmatpush1.msra.mxu0 %v1490
    %1587 = vmatprep.subr.mxu0 0.0
    %1588 = vmatpush1.msra.mxu0 %v1492
    %1589 = vmatprep.subr.mxu0 0.0
    %1590 = vmatpush1.msra.mxu0 %v1494
    %1591 = vmatprep.subr.mxu0 0.0
    %1592 = vmatpush1.msra.mxu0 %v1496
    %1593 = vmatprep.subr.mxu0 0.0
    %1594 = vmatpush1.msra.mxu0 %v1498
    %1595 = vmatprep.subr.mxu0 0.0
    %1596 = vmatpush1.msra.mxu0 %v1500
    %1597 = vmatprep.subr.mxu0 0.0
    %1598 = vmatpush1.msra.mxu0 %v1502
    %1599 = vmatprep.subr.mxu0 0.0
    %1600 = vmatpush1.msra.mxu0 %v1504
    %1601 = vmatprep.subr.mxu0 0.0
    %1602 = vmatpush1.msra.mxu0 %v1506
    %1603 = vmatprep.subr.mxu0 0.0
    %1604 = vmatpush1.msra.mxu0 %v1508
    %1605 = vmatprep.subr.mxu0 0.0
    %1606 = vmatpush1.msra.mxu0 %v1510
    %1607 = vmatprep.subr.mxu0 0.0
    %1608 = vmatpush1.msra.mxu0 %v1512
    %1609 = vmatprep.subr.mxu0 0.0
    %1610 = vmatpush1.msra.mxu0 %v1514
    %1611 = vmatprep.subr.mxu0 0.0
    %1612 = vmatpush1.msra.mxu0 %v1516
    %1613 = vmatprep.subr.mxu0 0.0
    %1614 = vmatpush1.msra.mxu0 %v1518
    %1615 = vmatprep.subr.mxu0 0.0
    %1616 = vmatpush1.msra.mxu0 %v1520
    %1617 = vmatprep.subr.mxu0 0.0
    %1618 = vmatpush1.msra.mxu0 %v1522
    %1619 = vmatprep.subr.mxu0 0.0
    %1620 = vmatpush1.msra.mxu0 %v1524
    %1621 = vmatprep.subr.mxu0 0.0
    %1622 = vmatpush1.msra.mxu0 %v1526
    %1623 = vmatprep.subr.mxu0 0.0
    %1624 = vmatpush1.msra.mxu0 %v1528
    %1625 = vmatprep.subr.mxu0 0.0
    %1626 = vmatpush1.msra.mxu0 %v1530
    %1627 = vmatprep.subr.mxu0 0.0
    %1628 = vmatpush1.msra.mxu0 %v1532
    %1629 = vmatprep.subr.mxu0 0.0
    %1630 = vmatpush1.msra.mxu0 %v1534
    %1631 = vmatprep.mubr.f32.mxu0 %v1377
    %1632 = vmatmul.mubr.f32.gmra.mrb[0].mxu0 %v1376
    %v1633 = vpop.f32.mrb[0].mxu0
    %v1634 = vadd.f32 0.0, %v1633
    %v1635 = vpop.f32.mrb[0].mxu0
    %1636 = vmatprep.mubr.f32.mxu0 %v1380
    %1637 = vmatmul.mubr.f32.gmra.mrb[0].mxu0 %v1379
    %v1638 = vpop.f32.mrb[0].mxu0
    %v1639 = vadd.f32 0.0, %v1638
    %v1640 = vpop.f32.mrb[0].mxu0
    %1641 = vmatprep.mubr.f32.mxu0 %v1383
    %1642 = vmatmul.mubr.f32.gmra.mrb[0].mxu0 %v1382
    %v1643 = vpop.f32.mrb[0].mxu0
    %v1644 = vadd.f32 0.0, %v1643
    %v1645 = vpop.f32.mrb[0].mxu0
    %1646 = vmatprep.mubr.f32.mxu0 %v1386
    %1647 = vmatmul.mubr.f32.gmra.mrb[0].mxu0 %v1385
    %v1648 = vpop.f32.mrb[0].mxu0
    %v1649 = vadd.f32 0.0, %v1648
    %v1650 = vpop.f32.mrb[0].mxu0
    %1651 = vmatprep.mubr.f32.mxu0 %v1389
    %1652 = vmatmul.mubr.f32.gmra.mrb[0].mxu0 %v1388
    %v1653 = vpop.f32.mrb[0].mxu0
    %v1654 = vadd.f32 0.0, %v1653
    %v1655 = vpop.f32.mrb[0].mxu0
    %1656 = vmatprep.mubr.f32.mxu0 %v1392
    %1657 = vmatmul.mubr.f32.gmra.mrb[0].mxu0 %v1391
    %v1658 = vpop.f32.mrb[0].mxu0
    %v1659 = vadd.f32 0.0, %v1658
    %v1660 = vpop.f32.mrb[0].mxu0
    %1661 = vmatprep.mubr.f32.mxu0 %v1395
    %1662 = vmatmul.mubr.f32.gmra.mrb[0].mxu0 %v1394
    %v1663 = vpop.f32.mrb[0].mxu0
    %v1664 = vadd.f32 0.0, %v1663
    %v1665 = vpop.f32.mrb[0].mxu0
    %1666 = vmatprep.mubr.f32.mxu0 %v1398
    %1667 = vmatmul.mubr.f32.gmra.mrb[0].mxu0 %v1397
    %v1668 = vpop.f32.mrb[0].mxu0
    %v1669 = vadd.f32 0.0, %v1668
    %v1670 = vpop.f32.mrb[0].mxu0
    %1671 = vmatprep.mubr.f32.mxu0 %v1401
    %1672 = vmatmul.mubr.f32.gmra.mrb[0].mxu0 %v1400
    %v1673 = vpop.f32.mrb[0].mxu0
    %v1674 = vadd.f32 0.0, %v1673
    %v1675 = vpop.f32.mrb[0].mxu0
    %1676 = vmatprep.mubr.f32.mxu0 %v1404
    %1677 = vmatmul.mubr.f32.gmra.mrb[0].mxu0 %v1403
    %v1678 = vpop.f32.mrb[0].mxu0
    %v1679 = vadd.f32 0.0, %v1678
    %v1680 = vpop.f32.mrb[0].mxu0
    %1681 = vmatprep.mubr.f32.mxu0 %v1407
    %1682 = vmatmul.mubr.f32.gmra.mrb[0].mxu0 %v1406
    %v1683 = vpop.f32.mrb[0].mxu0
    %v1684 = vadd.f32 0.0, %v1683
    %v1685 = vpop.f32.mrb[0].mxu0
    %1686 = vmatprep.mubr.f32.mxu0 %v1410
    %1687 = vmatmul.mubr.f32.gmra.mrb[0].mxu0 %v1409
    %v1688 = vpop.f32.mrb[0].mxu0
    %v1689 = vadd.f32 0.0, %v1688
    %v1690 = vpop.f32.mrb[0].mxu0
    %1691 = vmatprep.mubr.f32.mxu0 %v1413
    %1692 = vmatmul.mubr.f32.gmra.mrb[0].mxu0 %v1412
    %v1693 = vpop.f32.mrb[0].mxu0
    %v1694 = vadd.f32 0.0, %v1693
    %v1695 = vpop.f32.mrb[0].mxu0
    %1696 = vmatprep.mubr.f32.mxu0 %v1416
    %1697 = vmatmul.mubr.f32.gmra.mrb[0].mxu0 %v1415
    %v1698 = vpop.f32.mrb[0].mxu0
    %v1699 = vadd.f32 0.0, %v1698
    %v1700 = vpop.f32.mrb[0].mxu0
    %1701 = vmatprep.mubr.f32.mxu0 %v1419
    %1702 = vmatmul.mubr.f32.gmra.mrb[0].mxu0 %v1418
    %v1703 = vpop.f32.mrb[0].mxu0
    %v1704 = vadd.f32 0.0, %v1703
    %v1705 = vpop.f32.mrb[0].mxu0
    %1706 = vmatprep.mubr.f32.mxu0 %v1422
    %1707 = vmatmul.mubr.f32.gmra.mrb[0].mxu0 %v1421
    %v1708 = vpop.f32.mrb[0].mxu0
    %v1709 = vadd.f32 0.0, %v1708
    %v1710 = vpop.f32.mrb[0].mxu0
    %1711 = vmatprep.mubr.f32.mxu0 %v1425
    %1712 = vmatmul.mubr.f32.gmra.mrb[0].mxu0 %v1424
    %v1713 = vpop.f32.mrb[0].mxu0
    %v1714 = vadd.f32 0.0, %v1713
    %v1715 = vpop.f32.mrb[0].mxu0
    %1716 = vmatprep.mubr.f32.mxu0 %v1428
    %1717 = vmatmul.mubr.f32.gmra.mrb[0].mxu0 %v1427
    %v1718 = vpop.f32.mrb[0].mxu0
    %v1719 = vadd.f32 0.0, %v1718
    %v1720 = vpop.f32.mrb[0].mxu0
    %1721 = vmatprep.mubr.f32.mxu0 %v1431
    %1722 = vmatmul.mubr.f32.gmra.mrb[0].mxu0 %v1430
    %v1723 = vpop.f32.mrb[0].mxu0
    %v1724 = vadd.f32 0.0, %v1723
    %v1725 = vpop.f32.mrb[0].mxu0
    %1726 = vmatprep.mubr.f32.mxu0 %v1434
    %1727 = vmatmul.mubr.f32.gmra.mrb[0].mxu0 %v1433
    %v1728 = vpop.f32.mrb[0].mxu0
    %v1729 = vadd.f32 0.0, %v1728
    %v1730 = vpop.f32.mrb[0].mxu0
    %1731 = vmatprep.mubr.f32.mxu0 %v1437
    %1732 = vmatmul.mubr.f32.gmra.mrb[0].mxu0 %v1436
    %v1733 = vpop.f32.mrb[0].mxu0
    %v1734 = vadd.f32 0.0, %v1733
    %v1735 = vpop.f32.mrb[0].mxu0
    %1736 = vmatprep.mubr.f32.mxu0 %v1440
    %1737 = vmatmul.mubr.f32.gmra.mrb[0].mxu0 %v1439
    %v1738 = vpop.f32.mrb[0].mxu0
    %v1739 = vadd.f32 0.0, %v1738
    %v1740 = vpop.f32.mrb[0].mxu0
    %1741 = vmatprep.mubr.f32.mxu0 %v1443
    %1742 = vmatmul.mubr.f32.gmra.mrb[0].mxu0 %v1442
    %v1743 = vpop.f32.mrb[0].mxu0
    %v1744 = vadd.f32 0.0, %v1743
    %v1745 = vpop.f32.mrb[0].mxu0
    %1746 = vmatprep.mubr.f32.mxu0 %v1446
    %1747 = vmatmul.mubr.f32.gmra.mrb[0].mxu0 %v1445
    %v1748 = vpop.f32.mrb[0].mxu0
    %v1749 = vadd.f32 0.0, %v1748
    %v1750 = vpop.f32.mrb[0].mxu0
    %1751 = vmatprep.mubr.f32.mxu0 %v1449
    %1752 = vmatmul.mubr.f32.gmra.mrb[0].mxu0 %v1448
    %v1753 = vpop.f32.mrb[0].mxu0
    %v1754 = vadd.f32 0.0, %v1753
    %v1755 = vpop.f32.mrb[0].mxu0
    %1756 = vmatprep.mubr.f32.mxu0 %v1452
    %1757 = vmatmul.mubr.f32.gmra.mrb[0].mxu0 %v1451
    %v1758 = vpop.f32.mrb[0].mxu0
    %v1759 = vadd.f32 0.0, %v1758
    %v1760 = vpop.f32.mrb[0].mxu0
    %1761 = vmatprep.mubr.f32.mxu0 %v1455
    %1762 = vmatmul.mubr.f32.gmra.mrb[0].mxu0 %v1454
    %v1763 = vpop.f32.mrb[0].mxu0
    %v1764 = vadd.f32 0.0, %v1763
    %v1765 = vpop.f32.mrb[0].mxu0
    %1766 = vmatprep.mubr.f32.mxu0 %v1458
    %1767 = vmatmul.mubr.f32.gmra.mrb[0].mxu0 %v1457
    %v1768 = vpop.f32.mrb[0].mxu0
    %v1769 = vadd.f32 0.0, %v1768
    %v1770 = vpop.f32.mrb[0].mxu0
    %1771 = vmatprep.mubr.f32.mxu0 %v1461
    %1772 = vmatmul.mubr.f32.gmra.mrb[0].mxu0 %v1460
    %v1773 = vpop.f32.mrb[0].mxu0
    %v1774 = vadd.f32 0.0, %v1773
    %v1775 = vpop.f32.mrb[0].mxu0
    %1776 = vmatprep.mubr.f32.mxu0 %v1464
    %1777 = vmatmul.mubr.f32.gmra.mrb[0].mxu0 %v1463
    %v1778 = vpop.f32.mrb[0].mxu0
    %v1779 = vadd.f32 0.0, %v1778
    %v1780 = vpop.f32.mrb[0].mxu0
    %1781 = vmatprep.mubr.f32.mxu0 %v1467
    %1782 = vmatmul.mubr.f32.gmra.mrb[0].mxu0 %v1466
    %v1783 = vpop.f32.mrb[0].mxu0
    %v1784 = vadd.f32 0.0, %v1783
    %v1785 = vpop.f32.mrb[0].mxu0
    %1786 = vmatprep.mubr.f32.mxu0 %v1470
    %1787 = vmatmul.mubr.f32.gmra.mrb[0].mxu0 %v1469
    %v1788 = vpop.f32.mrb[0].mxu0
    %v1789 = vadd.f32 0.0, %v1788
    %v1790 = vpop.f32.mrb[0].mxu0
    %1791 = vdwg.mxu0
    %1796 = vrot.lane.b32.xlu0 %v1654, 8
    %v1797 = vpop.permute.xlu0 %1796
    %1798 = vrot.lane.b32.xlu0 %v1659, 8
    %v1799 = vpop.permute.xlu0 %1798
    %1800 = vrot.lane.b32.xlu0 %v1664, 8
    %v1801 = vpop.permute.xlu0 %1800
    %1802 = vrot.lane.b32.xlu0 %v1669, 8
    %v1803 = vpop.permute.xlu0 %1802
    %1812 = vrot.lane.b32.xlu0 %v1674, 16
    %v1813 = vpop.permute.xlu0 %1812
    %1814 = vrot.lane.b32.xlu0 %v1679, 16
    %v1815 = vpop.permute.xlu0 %1814
    %1816 = vrot.lane.b32.xlu0 %v1684, 16
    %v1817 = vpop.permute.xlu0 %1816
    %1818 = vrot.lane.b32.xlu0 %v1689, 16
    %v1819 = vpop.permute.xlu0 %1818
    %1828 = vrot.lane.b32.xlu0 %v1694, 24
    %v1829 = vpop.permute.xlu0 %1828
    %1830 = vrot.lane.b32.xlu0 %v1699, 24
    %v1831 = vpop.permute.xlu0 %1830
    %1832 = vrot.lane.b32.xlu0 %v1704, 24
    %v1833 = vpop.permute.xlu0 %1832
    %1834 = vrot.lane.b32.xlu0 %v1709, 24
    %v1835 = vpop.permute.xlu0 %1834
    %v1840 = vsel %vm96, %v1634, %v1797
    %v1841 = vsel %vm96, %v1639, %v1799
    %v1842 = vsel %vm96, %v1644, %v1801
    %v1843 = vsel %vm96, %v1649, %v1803
    %vm1844 = vcmask 130048
    %v1845 = vsel %vm1844, %v1840, %v1813
    %v1846 = vsel %vm1844, %v1841, %v1815
    %v1847 = vsel %vm1844, %v1842, %v1817
    %v1848 = vsel %vm1844, %v1843, %v1819
    %vm1849 = vcmask 195584
    %v1850 = vsel %vm1849, %v1845, %v1829
    %v1851 = vsel %vm1849, %v1846, %v1831
    %v1852 = vsel %vm1849, %v1847, %v1833
    %v1853 = vsel %vm1849, %v1848, %v1835
    %1858 = vrot.lane.b32.xlu0 %v1734, 8
    %v1859 = vpop.permute.xlu0 %1858
    %1860 = vrot.lane.b32.xlu0 %v1739, 8
    %v1861 = vpop.permute.xlu0 %1860
    %1862 = vrot.lane.b32.xlu0 %v1744, 8
    %v1863 = vpop.permute.xlu0 %1862
    %1864 = vrot.lane.b32.xlu0 %v1749, 8
    %v1865 = vpop.permute.xlu0 %1864
    %1874 = vrot.lane.b32.xlu0 %v1754, 16
    %v1875 = vpop.permute.xlu0 %1874
    %1876 = vrot.lane.b32.xlu0 %v1759, 16
    %v1877 = vpop.permute.xlu0 %1876
    %1878 = vrot.lane.b32.xlu0 %v1764, 16
    %v1879 = vpop.permute.xlu0 %1878
    %1880 = vrot.lane.b32.xlu0 %v1769, 16
    %v1881 = vpop.permute.xlu0 %1880
    %1890 = vrot.lane.b32.xlu0 %v1774, 24
    %v1891 = vpop.permute.xlu0 %1890
    %1892 = vrot.lane.b32.xlu0 %v1779, 24
    %v1893 = vpop.permute.xlu0 %1892
    %1894 = vrot.lane.b32.xlu0 %v1784, 24
    %v1895 = vpop.permute.xlu0 %1894
    %1896 = vrot.lane.b32.xlu0 %v1789, 24
    %v1897 = vpop.permute.xlu0 %1896
    %v1902 = vsel %vm96, %v1714, %v1859
    %v1903 = vsel %vm96, %v1719, %v1861
    %v1904 = vsel %vm96, %v1724, %v1863
    %v1905 = vsel %vm96, %v1729, %v1865
    %v1906 = vsel %vm1844, %v1902, %v1875
    %v1907 = vsel %vm1844, %v1903, %v1877
    %v1908 = vsel %vm1844, %v1904, %v1879
    %v1909 = vsel %vm1844, %v1905, %v1881
    %v1910 = vsel %vm1849, %v1906, %v1891
    %v1911 = vsel %vm1849, %v1907, %v1893
    %v1912 = vsel %vm1849, %v1908, %v1895
    %v1913 = vsel %vm1849, %v1909, %v1897
    %v1914 = vld [vmem:[#allocation6] sm:$0xff]
    %v1915 = vld [vmem:[#allocation6 + $0x8] sm:$0xff]
    %v1916 = vld [vmem:[#allocation6 + $0x10] sm:$0xff]
    %v1917 = vld [vmem:[#allocation6 + $0x18] sm:$0xff]
    %v1918 = vld [vmem:[%s6] sm:$0x1]
    %v1920 = vlaneseq
    %v1921 = vshrl.u32 %v1920, 7
    %v1922 = vsub.s32 0, %v1921
    %v1923 = vrot.slane %v1918, %v1922
    %v1926 = vsel %vm292, %v1850, 0
    %v1929 = vsel %vm292, %v1851, 0
    %v1932 = vsel %vm292, %v1852, 0
    %v1935 = vsel %vm292, %v1853, 0
    %v1938 = vsel %vm292, %v1910, 0
    %v1941 = vsel %vm292, %v1911, 0
    %v1944 = vsel %vm292, %v1912, 0
    %v1947 = vsel %vm292, %v1913, 0
    %1949 = vmatprep.subr.mxu0 0.0
    %1950 = vmatpush1.msra.mxu0 %v1914
    %1951 = vmatprep.subr.mxu0 0.0
    %1952 = vmatpush1.msra.mxu0 %v1915
    %1953 = vmatprep.subr.mxu0 0.0
    %1954 = vmatpush1.msra.mxu0 %v1916
    %1955 = vmatprep.subr.mxu0 0.0
    %1956 = vmatpush1.msra.mxu0 %v1917
    %1957 = vmatprep.subr.mxu0 0.0
    %1958 = vmatpush1.msra.mxu0 0.0
    %1959 = vmatprep.subr.mxu0 0.0
    %1960 = vmatpush1.msra.mxu0 0.0
    %1961 = vmatprep.subr.mxu0 0.0
    %1962 = vmatpush1.msra.mxu0 0.0
    %1963 = vmatprep.subr.mxu0 0.0
    %1964 = vmatpush1.msra.mxu0 0.0
    %1965 = vmatprep.subr.mxu0 0.0
    %1966 = vmatpush1.msra.mxu0 0.0
    %1967 = vmatprep.subr.mxu0 0.0
    %1968 = vmatpush1.msra.mxu0 0.0
    %1969 = vmatprep.subr.mxu0 0.0
    %1970 = vmatpush1.msra.mxu0 0.0
    %1971 = vmatprep.subr.mxu0 0.0
    %1972 = vmatpush1.msra.mxu0 0.0
    %1973 = vmatprep.subr.mxu0 0.0
    %1974 = vmatpush1.msra.mxu0 0.0
    %1975 = vmatprep.subr.mxu0 0.0
    %1976 = vmatpush1.msra.mxu0 0.0
    %1977 = vmatprep.subr.mxu0 0.0
    %1978 = vmatpush1.msra.mxu0 0.0
    %1979 = vmatprep.subr.mxu0 0.0
    %1980 = vmatpush1.msra.mxu0 0.0
    %1981 = vmatprep.subr.mxu0 0.0
    %1982 = vmatpush1.msra.mxu0 0.0
    %1983 = vmatprep.subr.mxu0 0.0
    %1984 = vmatpush1.msra.mxu0 0.0
    %1985 = vmatprep.subr.mxu0 0.0
    %1986 = vmatpush1.msra.mxu0 0.0
    %1987 = vmatprep.subr.mxu0 0.0
    %1988 = vmatpush1.msra.mxu0 0.0
    %1989 = vmatprep.subr.mxu0 0.0
    %1990 = vmatpush1.msra.mxu0 0.0
    %1991 = vmatprep.subr.mxu0 0.0
    %1992 = vmatpush1.msra.mxu0 0.0
    %1993 = vmatprep.subr.mxu0 0.0
    %1994 = vmatpush1.msra.mxu0 0.0
    %1995 = vmatprep.subr.mxu0 0.0
    %1996 = vmatpush1.msra.mxu0 0.0
    %1997 = vmatprep.subr.mxu0 0.0
    %1998 = vmatpush1.msra.mxu0 0.0
    %1999 = vmatprep.subr.mxu0 0.0
    %2000 = vmatpush1.msra.mxu0 0.0
    %2001 = vmatprep.subr.mxu0 0.0
    %2002 = vmatpush1.msra.mxu0 0.0
    %2003 = vmatprep.subr.mxu0 0.0
    %2004 = vmatpush1.msra.mxu0 0.0
    %2005 = vmatprep.subr.mxu0 0.0
    %2006 = vmatpush1.msra.mxu0 0.0
    %2007 = vmatprep.subr.mxu0 0.0
    %2008 = vmatpush1.msra.mxu0 0.0
    %2009 = vmatprep.subr.mxu0 0.0
    %2010 = vmatpush1.msra.mxu0 0.0
    %2011 = vmatprep.subr.mxu0 0.0
    %2012 = vmatpush1.msra.mxu0 0.0
    %2013 = vmatprep.mubr.f32.mxu0 0.0
    %2014 = vmatmul.mubr.f32.gmra.mrb[0].mxu0 %v1926
    %v2015 = vpop.f32.mrb[0].mxu0
    %v2016 = vadd.f32 %v1923, %v2015
    %v2017 = vpop.f32.mrb[0].mxu0
    %2018 = vmatprep.mubr.f32.mxu0 0.0
    %2019 = vmatmul.mubr.f32.gmra.mrb[0].mxu0 %v1929
    %v2020 = vpop.f32.mrb[0].mxu0
    %v2021 = vadd.f32 %v1923, %v2020
    %v2022 = vpop.f32.mrb[0].mxu0
    %2023 = vmatprep.mubr.f32.mxu0 0.0
    %2024 = vmatmul.mubr.f32.gmra.mrb[0].mxu0 %v1932
    %v2025 = vpop.f32.mrb[0].mxu0
    %v2026 = vadd.f32 %v1923, %v2025
    %v2027 = vpop.f32.mrb[0].mxu0
    %2028 = vmatprep.mubr.f32.mxu0 0.0
    %2029 = vmatmul.mubr.f32.gmra.mrb[0].mxu0 %v1935
    %v2030 = vpop.f32.mrb[0].mxu0
    %v2031 = vadd.f32 %v1923, %v2030
    %v2032 = vpop.f32.mrb[0].mxu0
    %2033 = vmatprep.mubr.f32.mxu0 0.0
    %2034 = vmatmul.mubr.f32.gmra.mrb[0].mxu0 %v1938
    %v2035 = vpop.f32.mrb[0].mxu0
    %v2036 = vadd.f32 %v1923, %v2035
    %v2037 = vpop.f32.mrb[0].mxu0
    %2038 = vmatprep.mubr.f32.mxu0 0.0
    %2039 = vmatmul.mubr.f32.gmra.mrb[0].mxu0 %v1941
    %v2040 = vpop.f32.mrb[0].mxu0
    %v2041 = vadd.f32 %v1923, %v2040
    %v2042 = vpop.f32.mrb[0].mxu0
    %2043 = vmatprep.mubr.f32.mxu0 0.0
    %2044 = vmatmul.mubr.f32.gmra.mrb[0].mxu0 %v1944
    %v2045 = vpop.f32.mrb[0].mxu0
    %v2046 = vadd.f32 %v1923, %v2045
    %v2047 = vpop.f32.mrb[0].mxu0
    %2048 = vmatprep.mubr.f32.mxu0 0.0
    %2049 = vmatmul.mubr.f32.gmra.mrb[0].mxu0 %v1947
    %v2050 = vpop.f32.mrb[0].mxu0
    %v2051 = vadd.f32 %v1923, %v2050
    %v2052 = vpop.f32.mrb[0].mxu0
    %2053 = vdwg.mxu0
    %v2054 = vadd.f32 %v2016, %v176
    %v2055 = vadd.f32 %v2021, %v181
    %v2056 = vadd.f32 %v2026, %v186
    %v2057 = vadd.f32 %v2031, %v191
    %v2058 = vadd.f32 %v2036, %v263
    %v2059 = vadd.f32 %v2041, %v268
    %v2060 = vadd.f32 %v2046, %v273
    %v2061 = vadd.f32 %v2051, %v278
    %v2062 = vsel %vm292, %v2054, 0.0
    %2063 = vadd.xlane.f32.xlu0 %v2062
    %v2064 = vpop.xlane.xlu0 %2063
    %v2065 = vsel %vm292, %v2055, 0.0
    %2066 = vadd.xlane.f32.xlu0 %v2065
    %v2067 = vpop.xlane.xlu0 %2066
    %v2068 = vsel %vm292, %v2056, 0.0
    %2069 = vadd.xlane.f32.xlu0 %v2068
    %v2070 = vpop.xlane.xlu0 %2069
    %v2071 = vsel %vm292, %v2057, 0.0
    %2072 = vadd.xlane.f32.xlu0 %v2071
    %v2073 = vpop.xlane.xlu0 %2072
    %v2074 = vsel %vm292, %v2058, 0.0
    %2075 = vadd.xlane.f32.xlu0 %v2074
    %v2076 = vpop.xlane.xlu0 %2075
    %v2077 = vsel %vm292, %v2059, 0.0
    %2078 = vadd.xlane.f32.xlu0 %v2077
    %v2079 = vpop.xlane.xlu0 %2078
    %v2080 = vsel %vm292, %v2060, 0.0
    %2081 = vadd.xlane.f32.xlu0 %v2080
    %v2082 = vpop.xlane.xlu0 %2081
    %v2083 = vsel %vm292, %v2061, 0.0
    %2084 = vadd.xlane.f32.xlu0 %v2083
    %v2085 = vpop.xlane.xlu0 %2084
    %v2086 = vrcp.pop 32.0
    %v2087 = vmul.f32 %v2064, %v2086
    %v2088 = vmul.f32 %v2067, %v2086
    %v2089 = vmul.f32 %v2070, %v2086
    %v2090 = vmul.f32 %v2073, %v2086
    %v2091 = vmul.f32 %v2076, %v2086
    %v2092 = vmul.f32 %v2079, %v2086
    %v2093 = vmul.f32 %v2082, %v2086
    %v2094 = vmul.f32 %v2085, %v2086
    %v2095 = vsub.f32 %v2054, %v2087
    %v2096 = vsub.f32 %v2055, %v2088
    %v2097 = vsub.f32 %v2056, %v2089
    %v2098 = vsub.f32 %v2057, %v2090
    %v2099 = vsub.f32 %v2058, %v2091
    %v2100 = vsub.f32 %v2059, %v2092
    %v2101 = vsub.f32 %v2060, %v2093
    %v2102 = vsub.f32 %v2061, %v2094
    %v2103 = vmul.f32 %v2095, %v2095
    %v2104 = vmul.f32 %v2096, %v2096
    %v2105 = vmul.f32 %v2097, %v2097
    %v2106 = vmul.f32 %v2098, %v2098
    %v2107 = vmul.f32 %v2099, %v2099
    %v2108 = vmul.f32 %v2100, %v2100
    %v2109 = vmul.f32 %v2101, %v2101
    %v2110 = vmul.f32 %v2102, %v2102
    %v2111 = vsel %vm292, %v2103, 0.0
    %2112 = vadd.xlane.f32.xlu0 %v2111
    %v2113 = vpop.xlane.xlu0 %2112
    %v2114 = vsel %vm292, %v2104, 0.0
    %2115 = vadd.xlane.f32.xlu0 %v2114
    %v2116 = vpop.xlane.xlu0 %2115
    %v2117 = vsel %vm292, %v2105, 0.0
    %2118 = vadd.xlane.f32.xlu0 %v2117
    %v2119 = vpop.xlane.xlu0 %2118
    %v2120 = vsel %vm292, %v2106, 0.0
    %2121 = vadd.xlane.f32.xlu0 %v2120
    %v2122 = vpop.xlane.xlu0 %2121
    %v2123 = vsel %vm292, %v2107, 0.0
    %2124 = vadd.xlane.f32.xlu0 %v2123
    %v2125 = vpop.xlane.xlu0 %2124
    %v2126 = vsel %vm292, %v2108, 0.0
    %2127 = vadd.xlane.f32.xlu0 %v2126
    %v2128 = vpop.xlane.xlu0 %2127
    %v2129 = vsel %vm292, %v2109, 0.0
    %2130 = vadd.xlane.f32.xlu0 %v2129
    %v2131 = vpop.xlane.xlu0 %2130
    %v2132 = vsel %vm292, %v2110, 0.0
    %2133 = vadd.xlane.f32.xlu0 %v2132
    %v2134 = vpop.xlane.xlu0 %2133
    %v2135 = vmul.f32 %v2113, %v2086
    %v2136 = vmul.f32 %v2116, %v2086
    %v2137 = vmul.f32 %v2119, %v2086
    %v2138 = vmul.f32 %v2122, %v2086
    %v2139 = vmul.f32 %v2125, %v2086
    %v2140 = vmul.f32 %v2128, %v2086
    %v2141 = vmul.f32 %v2131, %v2086
    %v2142 = vmul.f32 %v2134, %v2086
    %v2143 = vadd.f32 %v2135, 1e-05
    %v2144 = vadd.f32 %v2136, 1e-05
    %v2145 = vadd.f32 %v2137, 1e-05
    %v2146 = vadd.f32 %v2138, 1e-05
    %v2147 = vadd.f32 %v2139, 1e-05
    %v2148 = vadd.f32 %v2140, 1e-05
    %v2149 = vadd.f32 %v2141, 1e-05
    %v2150 = vadd.f32 %v2142, 1e-05
    %v2151 = vrsqrt.pop %v2143
    %v2152 = vrsqrt.pop %v2144
    %v2153 = vrsqrt.pop %v2145
    %v2154 = vrsqrt.pop %v2146
    %v2155 = vrsqrt.pop %v2147
    %v2156 = vrsqrt.pop %v2148
    %v2157 = vrsqrt.pop %v2149
    %v2158 = vrsqrt.pop %v2150
    %v2159 = vmul.f32 %v2095, %v2151
    %v2160 = vmul.f32 %v2096, %v2152
    %v2161 = vmul.f32 %v2097, %v2153
    %v2162 = vmul.f32 %v2098, %v2154
    %v2163 = vmul.f32 %v2099, %v2155
    %v2164 = vmul.f32 %v2100, %v2156
    %v2165 = vmul.f32 %v2101, %v2157
    %v2166 = vmul.f32 %v2102, %v2158
    %v2167 = vld [vmem:[#allocation7] sm:$0x1]
    %v2169 = vlaneseq
    %v2170 = vshrl.u32 %v2169, 7
    %v2171 = vsub.s32 0, %v2170
    %v2172 = vrot.slane %v2167, %v2171
    %v2174 = vmul.f32 %v2159, %v2172
    %v2175 = vmul.f32 %v2160, %v2172
    %v2176 = vmul.f32 %v2161, %v2172
    %v2177 = vmul.f32 %v2162, %v2172
    %v2178 = vmul.f32 %v2163, %v2172
    %v2179 = vmul.f32 %v2164, %v2172
    %v2180 = vmul.f32 %v2165, %v2172
    %v2181 = vmul.f32 %v2166, %v2172
    %v2182 = vld [vmem:[%s8] sm:$0x1]
    %v2184 = vlaneseq
    %v2185 = vshrl.u32 %v2184, 7
    %v2186 = vsub.s32 0, %v2185
    %v2187 = vrot.slane %v2182, %v2186
    %v2189 = vadd.f32 %v2174, %v2187
    %v2190 = vadd.f32 %v2175, %v2187
    %v2191 = vadd.f32 %v2176, %v2187
    %v2192 = vadd.f32 %v2177, %v2187
    %v2193 = vadd.f32 %v2178, %v2187
    %v2194 = vadd.f32 %v2179, %v2187
    %v2195 = vadd.f32 %v2180, %v2187
    %v2196 = vadd.f32 %v2181, %v2187
    %v2197 = vld [vmem:[%s9] sm:$0xff]
    %v2198 = vld [vmem:[%s9 + $0x8] sm:$0xff]
    %v2199 = vld [vmem:[%s9 + $0x10] sm:$0xff]
    %v2200 = vld [vmem:[%s9 + $0x18] sm:$0xff]
    %v2201 = vld [vmem:[%s10] sm:$0x1]
    %v2203 = vlaneseq
    %v2204 = vshrl.u32 %v2203, 7
    %v2205 = vsub.s32 0, %v2204
    %v2206 = vrot.slane %v2201, %v2205
    %v2209 = vsel %vm292, %v2189, 0
    %v2212 = vsel %vm292, %v2190, 0
    %v2215 = vsel %vm292, %v2191, 0
    %v2218 = vsel %vm292, %v2192, 0
    %v2221 = vsel %vm292, %v2193, 0
    %v2224 = vsel %vm292, %v2194, 0
    %v2227 = vsel %vm292, %v2195, 0
    %v2230 = vsel %vm292, %v2196, 0
    %2232 = vmatprep.subr.mxu0 0.0
    %2233 = vmatpush1.msra.mxu0 %v2197
    %2234 = vmatprep.subr.mxu0 0.0
    %2235 = vmatpush1.msra.mxu0 %v2198
    %2236 = vmatprep.subr.mxu0 0.0
    %2237 = vmatpush1.msra.mxu0 %v2199
    %2238 = vmatprep.subr.mxu0 0.0
    %2239 = vmatpush1.msra.mxu0 %v2200
    %2240 = vmatprep.subr.mxu0 0.0
    %2241 = vmatpush1.msra.mxu0 0.0
    %2242 = vmatprep.subr.mxu0 0.0
    %2243 = vmatpush1.msra.mxu0 0.0
    %2244 = vmatprep.subr.mxu0 0.0
    %2245 = vmatpush1.msra.mxu0 0.0
    %2246 = vmatprep.subr.mxu0 0.0
    %2247 = vmatpush1.msra.mxu0 0.0
    %2248 = vmatprep.subr.mxu0 0.0
    %2249 = vmatpush1.msra.mxu0 0.0
    %2250 = vmatprep.subr.mxu0 0.0
    %2251 = vmatpush1.msra.mxu0 0.0
    %2252 = vmatprep.subr.mxu0 0.0
    %2253 = vmatpush1.msra.mxu0 0.0
    %2254 = vmatprep.subr.mxu0 0.0
    %2255 = vmatpush1.msra.mxu0 0.0
    %2256 = vmatprep.subr.mxu0 0.0
    %2257 = vmatpush1.msra.mxu0 0.0
    %2258 = vmatprep.subr.mxu0 0.0
    %2259 = vmatpush1.msra.mxu0 0.0
    %2260 = vmatprep.subr.mxu0 0.0
    %2261 = vmatpush1.msra.mxu0 0.0
    %2262 = vmatprep.subr.mxu0 0.0
    %2263 = vmatpush1.msra.mxu0 0.0
    %2264 = vmatprep.subr.mxu0 0.0
    %2265 = vmatpush1.msra.mxu0 0.0
    %2266 = vmatprep.subr.mxu0 0.0
    %2267 = vmatpush1.msra.mxu0 0.0
    %2268 = vmatprep.subr.mxu0 0.0
    %2269 = vmatpush1.msra.mxu0 0.0
    %2270 = vmatprep.subr.mxu0 0.0
    %2271 = vmatpush1.msra.mxu0 0.0
    %2272 = vmatprep.subr.mxu0 0.0
    %2273 = vmatpush1.msra.mxu0 0.0
    %2274 = vmatprep.subr.mxu0 0.0
    %2275 = vmatpush1.msra.mxu0 0.0
    %2276 = vmatprep.subr.mxu0 0.0
    %2277 = vmatpush1.msra.mxu0 0.0
    %2278 = vmatprep.subr.mxu0 0.0
    %2279 = vmatpush1.msra.mxu0 0.0
    %2280 = vmatprep.subr.mxu0 0.0
    %2281 = vmatpush1.msra.mxu0 0.0
    %2282 = vmatprep.subr.mxu0 0.0
    %2283 = vmatpush1.msra.mxu0 0.0
    %2284 = vmatprep.subr.mxu0 0.0
    %2285 = vmatpush1.msra.mxu0 0.0
    %2286 = vmatprep.subr.mxu0 0.0
    %2287 = vmatpush1.msra.mxu0 0.0
    %2288 = vmatprep.subr.mxu0 0.0
    %2289 = vmatpush1.msra.mxu0 0.0
    %2290 = vmatprep.subr.mxu0 0.0
    %2291 = vmatpush1.msra.mxu0 0.0
    %2292 = vmatprep.subr.mxu0 0.0
    %2293 = vmatpush1.msra.mxu0 0.0
    %2294 = vmatprep.subr.mxu0 0.0
    %2295 = vmatpush1.msra.mxu0 0.0
    %2296 = vmatprep.mubr.f32.mxu0 0.0
    %2297 = vmatmul.mubr.f32.gmra.mrb[0].mxu0 %v2209
    %v2298 = vpop.f32.mrb[0].mxu0
    %v2299 = vadd.f32 %v2206, %v2298
    %v2300 = vpop.f32.mrb[0].mxu0
    %2301 = vmatprep.mubr.f32.mxu0 0.0
    %2302 = vmatmul.mubr.f32.gmra.mrb[0].mxu0 %v2212
    %v2303 = vpop.f32.mrb[0].mxu0
    %v2304 = vadd.f32 %v2206, %v2303
    %v2305 = vpop.f32.mrb[0].mxu0
    %2306 = vmatprep.mubr.f32.mxu0 0.0
    %2307 = vmatmul.mubr.f32.gmra.mrb[0].mxu0 %v2215
    %v2308 = vpop.f32.mrb[0].mxu0
    %v2309 = vadd.f32 %v2206, %v2308
    %v2310 = vpop.f32.mrb[0].mxu0
    %2311 = vmatprep.mubr.f32.mxu0 0.0
    %2312 = vmatmul.mubr.f32.gmra.mrb[0].mxu0 %v2218
    %v2313 = vpop.f32.mrb[0].mxu0
    %v2314 = vadd.f32 %v2206, %v2313
    %v2315 = vpop.f32.mrb[0].mxu0
    %2316 = vmatprep.mubr.f32.mxu0 0.0
    %2317 = vmatmul.mubr.f32.gmra.mrb[0].mxu0 %v2221
    %v2318 = vpop.f32.mrb[0].mxu0
    %v2319 = vadd.f32 %v2206, %v2318
    %v2320 = vpop.f32.mrb[0].mxu0
    %2321 = vmatprep.mubr.f32.mxu0 0.0
    %2322 = vmatmul.mubr.f32.gmra.mrb[0].mxu0 %v2224
    %v2323 = vpop.f32.mrb[0].mxu0
    %v2324 = vadd.f32 %v2206, %v2323
    %v2325 = vpop.f32.mrb[0].mxu0
    %2326 = vmatprep.mubr.f32.mxu0 0.0
    %2327 = vmatmul.mubr.f32.gmra.mrb[0].mxu0 %v2227
    %v2328 = vpop.f32.mrb[0].mxu0
    %v2329 = vadd.f32 %v2206, %v2328
    %v2330 = vpop.f32.mrb[0].mxu0
    %2331 = vmatprep.mubr.f32.mxu0 0.0
    %2332 = vmatmul.mubr.f32.gmra.mrb[0].mxu0 %v2230
    %v2333 = vpop.f32.mrb[0].mxu0
    %v2334 = vadd.f32 %v2206, %v2333
    %v2335 = vpop.f32.mrb[0].mxu0
    %2336 = vdwg.mxu0
    %2337 = vst.msk [vmem:[%s11] sm:$0xff] %vm292, %v2299
    %2338 = vst.msk [vmem:[%s11 + $0x8] sm:$0xff] %vm292, %v2304
    %2339 = vst.msk [vmem:[%s11 + $0x10] sm:$0xff] %vm292, %v2309
    %2340 = vst.msk [vmem:[%s11 + $0x18] sm:$0xff] %vm292, %v2314
    %2341 = vst.msk [vmem:[%s11 + $0x20] sm:$0xff] %vm292, %v2319
    %2342 = vst.msk [vmem:[%s11 + $0x28] sm:$0xff] %vm292, %v2324
    %2343 = vst.msk [vmem:[%s11 + $0x30] sm:$0xff] %vm292, %v2329
    %2344 = vst.msk [vmem:[%s11 + $0x38] sm:$0xff] %vm292, %v2334
    // Predicated region
    $region62: #{tpu_custom_call.1} parent=1 // pred_check
      _
    $region63: #{tpu_custom_call.1} parent=1 // pred_check_branch
      %2346 = sbr.rel (0) target = $region65
    $region64: #{tpu_custom_call.1} parent=1 // pred_region
      _
    $region65: #{tpu_custom_call.1} parent=1 // pred_fallthru
      _
    // Predicated region
    $region66: #{tpu_custom_call.1} parent=1 // pred_check
      _
    $region67: #{tpu_custom_call.1} parent=1 // pred_check_branch
      %2348 = sbr.rel (0) target = $region69
    $region68: #{tpu_custom_call.1} parent=1 // pred_region
      _
    $region69: #{tpu_custom_call.1} parent=1 // pred_fallthru
      _
    %2349 = vsyncpa [#allocation3], 1
    %2350 = vsyncpa [#allocation5], 1
    %2351 = vsyncpa [#allocation8], 1

</llo_original>
